<compile_context>
chip_gen: v7x
topology: tpu7x:2x2x1
jax: 0.10.0
libtpu: 0.0.40
codegen_flags: <defaults>
</compile_context>

<pallas_src>
import functools

import jax
import jax.numpy as jnp
from jax.experimental import pallas as pl
from jax.experimental.pallas import tpu as pltpu

LATENT = 123
LPAD = 128  # latent dim padded to one full lane width


def _leaky_f32(x, slope=0.5):
    return jnp.where(x >= 0, x, slope * x)


def reinventor_kernel(cw_ref, x_ref, band_ref, w1_ref, b1_ref,
                      w2e_ref, b2e_ref, w2o_ref, b2o_ref,
                      w3_ref, b3_ref,
                      w4e_ref, b4e_ref, w4o_ref, b4o_ref,
                      out_ref, *, bf16_elem: bool, banded_conv: bool):
    f32, bf16 = jnp.float32, jnp.bfloat16
    x = x_ref[...]                                    # (BM, 128) f32, cols 123..127 == 0
    cb = cw_ref[3]                                    # conv bias (SMEM scalar)

    def act(z, slope):
        """LeakyReLU on an f32 pre-activation; returns bf16 ready for the next dot."""
        if bf16_elem:
            zb = z.astype(bf16)                       # packed bf16 VPU (v6e/v7x)
            return jnp.where(zb >= 0, zb, slope * zb)
        h = jnp.where(z >= 0, z, slope * z)           # f32 VPU (v5e path)
        return h.astype(bf16)

    # --- Conv1d(1, 1, kernel_size=3, padding=1) + LeakyReLU(0.5) -----------
    if banded_conv:
        # Tri-diagonal 128x128 bf16 matrix on the MXU (columns/rows 123..127
        # are zero, so the lane padding is annihilated exactly).
        z0 = jnp.dot(x.astype(bf16), band_ref[...],
                     preferred_element_type=f32) + cb
    else:
        # roll wraps the zero pad columns into the out-of-range taps, which is
        # exactly the zero padding the conv wants.
        w0, w1c, w2c = cw_ref[0], cw_ref[1], cw_ref[2]
        x_prev = pltpu.roll(x, shift=1, axis=1)        # x_prev[:, j] = x[:, j-1]
        x_next = pltpu.roll(x, shift=LPAD - 1, axis=1) # x_next[:, j] = x[:, j+1]
        z0 = w0 * x_prev + w1c * x + w2c * x_next + cb
    # Garbage in cols 123..127 is annihilated by the zeroed rows of W1.
    h = act(z0, 0.5)                                   # (BM, 128) bf16

    # --- Linear(123, 256) + LeakyReLU(0.5) (weight rows 123..127 are zero) --
    z1 = jnp.dot(h, w1_ref[...], preferred_element_type=f32) + b1_ref[...]
    h = act(z1, 0.5)                                   # (BM, 256) bf16

    # --- Linear(256,1024) + Leaky + MaxPool(2,2) + Leaky, fused with
    #     Linear(512,256) ----------------------------------------------------
    # Pool folded into even/odd weight halves (LeakyReLU is monotone):
    #   pool(leaky(z)) == leaky(max(z_even, z_odd)),
    # and leaky(leaky(x,0.5),0.5) == leaky(x, 0.25).  The 512 pooled columns
    # are produced in two 256-wide chunks, each immediately consumed by the
    # matching 256-row slice of W3 (partial sums), so the full (BM,512) f32
    # intermediates never live at once.
    acc3 = jnp.zeros((x.shape[0], 256), f32)
    for c in range(2):
        lo, hi = c * 256, (c + 1) * 256
        ze = jnp.dot(h, w2e_ref[:, lo:hi], preferred_element_type=f32) + b2e_ref[:, lo:hi]
        zo = jnp.dot(h, w2o_ref[:, lo:hi], preferred_element_type=f32) + b2o_ref[:, lo:hi]
        hc = act(jnp.maximum(ze, zo), 0.25)            # (BM, 256) bf16
        acc3 = acc3 + jnp.dot(hc, w3_ref[lo:hi, :], preferred_element_type=f32)

    # --- Linear(512, 256) + LeakyReLU(0.5) ----------------------------------
    h = act(acc3 + b3_ref[...], 0.5)                   # (BM, 256) bf16

    # --- Linear(256, 246) + MaxPool(2,2) folded, then Tanh ------------------
    ze = jnp.dot(h, w4e_ref[...], preferred_element_type=f32) + b4e_ref[...]
    zo = jnp.dot(h, w4o_ref[...], preferred_element_type=f32) + b4o_ref[...]
    out_ref[...] = jnp.tanh(jnp.maximum(ze, zo))       # (BM, 128) f32


def make_params(key, latent=LATENT):
    """Deterministic synthetic parameters (torch-like fan-in scaling)."""
    ks = jax.random.split(key, 6)

    def lin(k, fan_in, fan_out):
        kw, kb = jax.random.split(k)
        s = 1.0 / jnp.sqrt(float(fan_in))
        W = jax.random.uniform(kw, (fan_in, fan_out), jnp.float32, -s, s)
        b = jax.random.uniform(kb, (fan_out,), jnp.float32, -s, s)
        return W, b

    s3 = 1.0 / jnp.sqrt(3.0)
    conv_w = jax.random.uniform(ks[0], (3,), jnp.float32, -s3, s3)
    conv_b = jax.random.uniform(ks[1], (), jnp.float32, -s3, s3)
    W1, b1 = lin(ks[2], latent, 256)
    W2, b2 = lin(ks[3], 256, 1024)
    W3, b3 = lin(ks[4], 512, 256)
    W4, b4 = lin(ks[5], 256, 2 * latent)
    return dict(conv_w=conv_w, conv_b=conv_b, W1=W1, b1=b1, W2=W2, b2=b2,
                W3=W3, b3=b3, W4=W4, b4=b4)


def prepare_params(params, latent=LATENT):
    """One-time prep: pad, fold MaxPool into Linears, build conv band, cast bf16."""
    f32, bf16 = jnp.float32, jnp.bfloat16

    cw = jnp.concatenate([params["conv_w"], params["conv_b"][None]]).astype(f32)

    # Tri-diagonal conv matrix:  out[:, j] = w0*x[:,j-1] + w1*x[:,j] + w2*x[:,j+1]
    w = params["conv_w"]
    j = jnp.arange(latent)
    band = jnp.zeros((LPAD, LPAD), f32)
    band = band.at[j, j].set(w[1])                    # center tap
    band = band.at[j[1:] - 1, j[1:]].set(w[0])        # left tap (j >= 1)
    band = band.at[j[:-1] + 1, j[:-1]].set(w[2])      # right tap (j <= latent-2)
    band = band.astype(bf16)

    W1p = jnp.zeros((LPAD, 256), f32).at[:latent].set(params["W1"]).astype(bf16)
    b1 = params["b1"].astype(f32)[None, :]

    W2, b2 = params["W2"], params["b2"]
    W2E = W2[:, 0::2].astype(bf16)                    # (256, 512)
    W2O = W2[:, 1::2].astype(bf16)
    b2E = b2[0::2].astype(f32)[None, :]
    b2O = b2[1::2].astype(f32)[None, :]

    W3 = params["W3"].astype(bf16)                    # (512, 256)
    b3 = params["b3"].astype(f32)[None, :]

    W4, b4 = params["W4"], params["b4"]               # (256, 246), (246,)
    W4E = jnp.zeros((256, LPAD), f32).at[:, :latent].set(W4[:, 0::2]).astype(bf16)
    W4O = jnp.zeros((256, LPAD), f32).at[:, :latent].set(W4[:, 1::2]).astype(bf16)
    b4E = jnp.zeros((1, LPAD), f32).at[0, :latent].set(b4[0::2])
    b4O = jnp.zeros((1, LPAD), f32).at[0, :latent].set(b4[1::2])

    return dict(cw=cw, band=band, W1=W1p, b1=b1, W2E=W2E, b2E=b2E, W2O=W2O,
                b2O=b2O, W3=W3, b3=b3, W4E=W4E, b4E=b4E, W4O=W4O, b4O=b4O)


def _fast_vpu_generation():
    """True on TPU generations with packed-bf16 VPU / MXU slack (v6e, v7x, ...)."""
    try:
        kind = jax.devices()[0].device_kind.lower()
    except Exception:
        return True
    return not any(f"v{g}" in kind for g in (2, 3, 4, 5))


def reinventor_forward(x, prep, *, cap=512):
    """x: (N, 1, latent) float32, NCL like the PyTorch module. Returns (N, 1, latent)."""
    N, _, latent = x.shape
    xs = x[:, 0, :].astype(jnp.float32)

    # Batch tile: multiple of 8 sublanes, capped at `cap`; when the batch
    # allows it, keep >= 2 grid steps so the parallel axis can be sharded
    # across both TensorCores on v7x.
    N8 = max(8, ((N + 7) // 8) * 8)
    if N8 > 8:
        BM = min(cap, ((N8 // 2 + 7) // 8) * 8)
    else:
        BM = 8
    NP = ((N8 + BM - 1) // BM) * BM
    x_pad = jnp.zeros((NP, LPAD), jnp.float32).at[:N, :latent].set(xs)

    fast = _fast_vpu_generation()
    kernel = functools.partial(reinventor_kernel,
                               bf16_elem=fast, banded_conv=fast)

    vmem_full = pl.BlockSpec(memory_space=pltpu.MemorySpace.VMEM)   # whole array, resident
    smem_full = pl.BlockSpec(memory_space=pltpu.MemorySpace.SMEM)

    out = pl.pallas_call(
        kernel,
        out_shape=jax.ShapeDtypeStruct((NP, LPAD), jnp.float32),
        grid=(NP // BM,),
        in_specs=[smem_full,                                        # conv taps + bias
                  pl.BlockSpec((BM, LPAD), lambda i: (i, 0))]       # activation tile
                 + [vmem_full] * 13,                                # weights / biases / band
        out_specs=pl.BlockSpec((BM, LPAD), lambda i: (i, 0)),
        compiler_params=pltpu.CompilerParams(
            dimension_semantics=("parallel",)),
    )(prep["cw"], x_pad, prep["band"], prep["W1"], prep["b1"],
      prep["W2E"], prep["b2E"], prep["W2O"], prep["b2O"],
      prep["W3"], prep["b3"],
      prep["W4E"], prep["b4E"], prep["W4O"], prep["b4O"])
    return out[:N, None, :latent]


def reinventor_reference(x, params):
    """Pure-JAX f32 mirror of the PyTorch forward for validation."""
    xs = x[:, 0, :].astype(jnp.float32)
    N, L = xs.shape
    xp = jnp.pad(xs, ((0, 0), (1, 1)))
    cw, cb = params["conv_w"], params["conv_b"]
    h = cw[0] * xp[:, :-2] + cw[1] * xp[:, 1:-1] + cw[2] * xp[:, 2:] + cb
    h = _leaky_f32(h)
    h = _leaky_f32(h @ params["W1"] + params["b1"])
    h = _leaky_f32(h @ params["W2"] + params["b2"])
    h = h.reshape(N, 512, 2).max(axis=-1)
    h = _leaky_f32(h)
    h = _leaky_f32(h @ params["W3"] + params["b3"])
    h = h @ params["W4"] + params["b4"]
    h = h.reshape(N, L, 2).max(axis=-1)
    return jnp.tanh(h)[:, None, :]


if __name__ == "__main__":
    key = jax.random.PRNGKey(0)
    kp, kx = jax.random.split(key)
    params = make_params(kp)
    prep = prepare_params(params)           # one-time fold/pad/bf16-cast

    N = 8
    x = jax.random.normal(kx, (N, 1, LATENT), jnp.float32)

    out = jax.block_until_ready(reinventor_forward(x, prep))
    ref = reinventor_reference(x, params)

    assert out.shape == (N, 1, LATENT), out.shape
    err = float(jnp.max(jnp.abs(out - ref)))
    if err < 2e-2:
        print("KERNEL_OK")
    else:
        print(f"MISMATCH max_abs_err={err}")
</pallas_src>

<mosaic_0001>
module attributes {stable_mosaic.version = 11 : i64} {
  func.func @reinventor_kernel(%arg0: i32, %arg1: memref<4xf32, #tpu.memory_space<smem>>, %arg2: memref<8x128xf32, #tpu.memory_space<vmem>>, %arg3: memref<128x128xbf16, #tpu.memory_space<vmem>>, %arg4: memref<128x256xbf16, #tpu.memory_space<vmem>>, %arg5: memref<1x256xf32, #tpu.memory_space<vmem>>, %arg6: memref<256x512xbf16, #tpu.memory_space<vmem>>, %arg7: memref<1x512xf32, #tpu.memory_space<vmem>>, %arg8: memref<256x512xbf16, #tpu.memory_space<vmem>>, %arg9: memref<1x512xf32, #tpu.memory_space<vmem>>, %arg10: memref<512x256xbf16, #tpu.memory_space<vmem>>, %arg11: memref<1x256xf32, #tpu.memory_space<vmem>>, %arg12: memref<256x128xbf16, #tpu.memory_space<vmem>>, %arg13: memref<1x128xf32, #tpu.memory_space<vmem>>, %arg14: memref<256x128xbf16, #tpu.memory_space<vmem>>, %arg15: memref<1x128xf32, #tpu.memory_space<vmem>>, %arg16: memref<8x128xf32, #tpu.memory_space<vmem>>) attributes {dimension_semantics = [#tpu.dimension_semantics<parallel>], iteration_bounds = array<i64: 1>, scalar_prefetch = 0 : i64, scratch_operands = 0 : i64, tpu.core_type = #tpu.core_type<tc>, window_params = [{transform_indices = @transform_0, window_bounds = array<i64: 4>}, {transform_indices = @transform_1, window_bounds = array<i64: 8, 128>}, {pipeline_mode = #tpu.pipeline_mode<synchronous>, transform_indices = @transform_2, window_bounds = array<i64: 128, 128>}, {pipeline_mode = #tpu.pipeline_mode<synchronous>, transform_indices = @transform_3, window_bounds = array<i64: 128, 256>}, {pipeline_mode = #tpu.pipeline_mode<synchronous>, transform_indices = @transform_4, window_bounds = array<i64: 1, 256>}, {pipeline_mode = #tpu.pipeline_mode<synchronous>, transform_indices = @transform_5, window_bounds = array<i64: 256, 512>}, {pipeline_mode = #tpu.pipeline_mode<synchronous>, transform_indices = @transform_6, window_bounds = array<i64: 1, 512>}, {pipeline_mode = #tpu.pipeline_mode<synchronous>, transform_indices = @transform_7, window_bounds = array<i64: 256, 512>}, {pipeline_mode = #tpu.pipeline_mode<synchronous>, transform_indices = @transform_8, window_bounds = array<i64: 1, 512>}, {pipeline_mode = #tpu.pipeline_mode<synchronous>, transform_indices = @transform_9, window_bounds = array<i64: 512, 256>}, {pipeline_mode = #tpu.pipeline_mode<synchronous>, transform_indices = @transform_10, window_bounds = array<i64: 1, 256>}, {pipeline_mode = #tpu.pipeline_mode<synchronous>, transform_indices = @transform_11, window_bounds = array<i64: 256, 128>}, {pipeline_mode = #tpu.pipeline_mode<synchronous>, transform_indices = @transform_12, window_bounds = array<i64: 1, 128>}, {pipeline_mode = #tpu.pipeline_mode<synchronous>, transform_indices = @transform_13, window_bounds = array<i64: 256, 128>}, {pipeline_mode = #tpu.pipeline_mode<synchronous>, transform_indices = @transform_14, window_bounds = array<i64: 1, 128>}, {transform_indices = @transform_15, window_bounds = array<i64: 8, 128>}]} {
    %c0 = arith.constant 0 : index
    %c0_0 = arith.constant 0 : index
    %0 = vector.load %arg2[%c0, %c0_0] : memref<8x128xf32, #tpu.memory_space<vmem>>, vector<8x128xf32>
    %c3 = arith.constant 3 : index
    %1 = memref.load %arg1[%c3] : memref<4xf32, #tpu.memory_space<smem>>
    %2 = arith.truncf %0 : vector<8x128xf32> to vector<8x128xbf16>
    %c0_1 = arith.constant 0 : index
    %c0_2 = arith.constant 0 : index
    %3 = vector.load %arg3[%c0_1, %c0_2] : memref<128x128xbf16, #tpu.memory_space<vmem>>, vector<128x128xbf16>
    %cst = arith.constant dense<0.000000e+00> : vector<8x128xf32>
    %4 = tpu.matmul %2, %3, %cst {dimension_numbers = #tpu.dot_dimension_numbers<[1], [0], [0], [1], [0, 0, 1, 1], [], []>} : vector<8x128xbf16>, vector<128x128xbf16>, vector<8x128xf32> -> vector<8x128xf32>
    %5 = vector.broadcast %1 : f32 to vector<8x128xf32>
    %6 = arith.addf %4, %5 : vector<8x128xf32>
    %7 = arith.truncf %6 : vector<8x128xf32> to vector<8x128xbf16>
    %cst_3 = arith.constant 0.000000e+00 : bf16
    %8 = vector.broadcast %cst_3 : bf16 to vector<8x128xbf16>
    %9 = arith.cmpf oge, %7, %8 : vector<8x128xbf16>
    %cst_4 = arith.constant 5.000000e-01 : bf16
    %10 = vector.broadcast %cst_4 : bf16 to vector<8x128xbf16>
    %11 = arith.mulf %10, %7 : vector<8x128xbf16>
    %12 = arith.select %9, %7, %11 : vector<8x128xi1>, vector<8x128xbf16>
    %c0_5 = arith.constant 0 : index
    %c0_6 = arith.constant 0 : index
    %13 = vector.load %arg4[%c0_5, %c0_6] : memref<128x256xbf16, #tpu.memory_space<vmem>>, vector<128x256xbf16>
    %cst_7 = arith.constant dense<0.000000e+00> : vector<8x256xf32>
    %14 = tpu.matmul %12, %13, %cst_7 {dimension_numbers = #tpu.dot_dimension_numbers<[1], [0], [0], [1], [0, 0, 1, 1], [], []>} : vector<8x128xbf16>, vector<128x256xbf16>, vector<8x256xf32> -> vector<8x256xf32>
    %c0_8 = arith.constant 0 : index
    %c0_9 = arith.constant 0 : index
    %15 = vector.load %arg5[%c0_8, %c0_9] : memref<1x256xf32, #tpu.memory_space<vmem>>, vector<1x256xf32>
    %16 = vector.broadcast %15 : vector<1x256xf32> to vector<8x256xf32>
    %17 = arith.addf %14, %16 : vector<8x256xf32>
    %18 = arith.truncf %17 : vector<8x256xf32> to vector<8x256xbf16>
    %cst_10 = arith.constant 0.000000e+00 : bf16
    %19 = vector.broadcast %cst_10 : bf16 to vector<8x256xbf16>
    %20 = arith.cmpf oge, %18, %19 : vector<8x256xbf16>
    %cst_11 = arith.constant 5.000000e-01 : bf16
    %21 = vector.broadcast %cst_11 : bf16 to vector<8x256xbf16>
    %22 = arith.mulf %21, %18 : vector<8x256xbf16>
    %23 = arith.select %20, %18, %22 : vector<8x256xi1>, vector<8x256xbf16>
    %cst_12 = arith.constant 0.000000e+00 : f32
    %24 = vector.broadcast %cst_12 : f32 to vector<8x256xf32>
    %c0_13 = arith.constant 0 : index
    %c0_14 = arith.constant 0 : index
    %25 = vector.load %arg6[%c0_13, %c0_14] : memref<256x512xbf16, #tpu.memory_space<vmem>>, vector<256x256xbf16>
    %cst_15 = arith.constant dense<0.000000e+00> : vector<8x256xf32>
    %26 = tpu.matmul %23, %25, %cst_15 {dimension_numbers = #tpu.dot_dimension_numbers<[1], [0], [0], [1], [0, 0, 1, 1], [], []>} : vector<8x256xbf16>, vector<256x256xbf16>, vector<8x256xf32> -> vector<8x256xf32>
    %c0_16 = arith.constant 0 : index
    %c0_17 = arith.constant 0 : index
    %27 = vector.load %arg7[%c0_16, %c0_17] : memref<1x512xf32, #tpu.memory_space<vmem>>, vector<1x256xf32>
    %28 = vector.broadcast %27 : vector<1x256xf32> to vector<8x256xf32>
    %29 = arith.addf %26, %28 : vector<8x256xf32>
    %c0_18 = arith.constant 0 : index
    %c0_19 = arith.constant 0 : index
    %30 = vector.load %arg8[%c0_18, %c0_19] : memref<256x512xbf16, #tpu.memory_space<vmem>>, vector<256x256xbf16>
    %cst_20 = arith.constant dense<0.000000e+00> : vector<8x256xf32>
    %31 = tpu.matmul %23, %30, %cst_20 {dimension_numbers = #tpu.dot_dimension_numbers<[1], [0], [0], [1], [0, 0, 1, 1], [], []>} : vector<8x256xbf16>, vector<256x256xbf16>, vector<8x256xf32> -> vector<8x256xf32>
    %c0_21 = arith.constant 0 : index
    %c0_22 = arith.constant 0 : index
    %32 = vector.load %arg9[%c0_21, %c0_22] : memref<1x512xf32, #tpu.memory_space<vmem>>, vector<1x256xf32>
    %33 = vector.broadcast %32 : vector<1x256xf32> to vector<8x256xf32>
    %34 = arith.addf %31, %33 : vector<8x256xf32>
    %35 = arith.maximumf %29, %34 : vector<8x256xf32>
    %36 = arith.truncf %35 : vector<8x256xf32> to vector<8x256xbf16>
    %cst_23 = arith.constant 0.000000e+00 : bf16
    %37 = vector.broadcast %cst_23 : bf16 to vector<8x256xbf16>
    %38 = arith.cmpf oge, %36, %37 : vector<8x256xbf16>
    %cst_24 = arith.constant 2.500000e-01 : bf16
    %39 = vector.broadcast %cst_24 : bf16 to vector<8x256xbf16>
    %40 = arith.mulf %39, %36 : vector<8x256xbf16>
    %41 = arith.select %38, %36, %40 : vector<8x256xi1>, vector<8x256xbf16>
    %c0_25 = arith.constant 0 : index
    %c0_26 = arith.constant 0 : index
    %42 = vector.load %arg10[%c0_25, %c0_26] : memref<512x256xbf16, #tpu.memory_space<vmem>>, vector<256x256xbf16>
    %cst_27 = arith.constant dense<0.000000e+00> : vector<8x256xf32>
    %43 = tpu.matmul %41, %42, %cst_27 {dimension_numbers = #tpu.dot_dimension_numbers<[1], [0], [0], [1], [0, 0, 1, 1], [], []>} : vector<8x256xbf16>, vector<256x256xbf16>, vector<8x256xf32> -> vector<8x256xf32>
    %44 = arith.addf %24, %43 : vector<8x256xf32>
    %c0_28 = arith.constant 0 : index
    %c256 = arith.constant 256 : index
    %45 = vector.load %arg6[%c0_28, %c256] : memref<256x512xbf16, #tpu.memory_space<vmem>>, vector<256x256xbf16>
    %cst_29 = arith.constant dense<0.000000e+00> : vector<8x256xf32>
    %46 = tpu.matmul %23, %45, %cst_29 {dimension_numbers = #tpu.dot_dimension_numbers<[1], [0], [0], [1], [0, 0, 1, 1], [], []>} : vector<8x256xbf16>, vector<256x256xbf16>, vector<8x256xf32> -> vector<8x256xf32>
    %c0_30 = arith.constant 0 : index
    %c256_31 = arith.constant 256 : index
    %47 = vector.load %arg7[%c0_30, %c256_31] : memref<1x512xf32, #tpu.memory_space<vmem>>, vector<1x256xf32>
    %48 = vector.broadcast %47 : vector<1x256xf32> to vector<8x256xf32>
    %49 = arith.addf %46, %48 : vector<8x256xf32>
    %c0_32 = arith.constant 0 : index
    %c256_33 = arith.constant 256 : index
    %50 = vector.load %arg8[%c0_32, %c256_33] : memref<256x512xbf16, #tpu.memory_space<vmem>>, vector<256x256xbf16>
    %cst_34 = arith.constant dense<0.000000e+00> : vector<8x256xf32>
    %51 = tpu.matmul %23, %50, %cst_34 {dimension_numbers = #tpu.dot_dimension_numbers<[1], [0], [0], [1], [0, 0, 1, 1], [], []>} : vector<8x256xbf16>, vector<256x256xbf16>, vector<8x256xf32> -> vector<8x256xf32>
    %c0_35 = arith.constant 0 : index
    %c256_36 = arith.constant 256 : index
    %52 = vector.load %arg9[%c0_35, %c256_36] : memref<1x512xf32, #tpu.memory_space<vmem>>, vector<1x256xf32>
    %53 = vector.broadcast %52 : vector<1x256xf32> to vector<8x256xf32>
    %54 = arith.addf %51, %53 : vector<8x256xf32>
    %55 = arith.maximumf %49, %54 : vector<8x256xf32>
    %56 = arith.truncf %55 : vector<8x256xf32> to vector<8x256xbf16>
    %cst_37 = arith.constant 0.000000e+00 : bf16
    %57 = vector.broadcast %cst_37 : bf16 to vector<8x256xbf16>
    %58 = arith.cmpf oge, %56, %57 : vector<8x256xbf16>
    %cst_38 = arith.constant 2.500000e-01 : bf16
    %59 = vector.broadcast %cst_38 : bf16 to vector<8x256xbf16>
    %60 = arith.mulf %59, %56 : vector<8x256xbf16>
    %61 = arith.select %58, %56, %60 : vector<8x256xi1>, vector<8x256xbf16>
    %c256_39 = arith.constant 256 : index
    %c0_40 = arith.constant 0 : index
    %62 = vector.load %arg10[%c256_39, %c0_40] : memref<512x256xbf16, #tpu.memory_space<vmem>>, vector<256x256xbf16>
    %cst_41 = arith.constant dense<0.000000e+00> : vector<8x256xf32>
    %63 = tpu.matmul %61, %62, %cst_41 {dimension_numbers = #tpu.dot_dimension_numbers<[1], [0], [0], [1], [0, 0, 1, 1], [], []>} : vector<8x256xbf16>, vector<256x256xbf16>, vector<8x256xf32> -> vector<8x256xf32>
    %64 = arith.addf %44, %63 : vector<8x256xf32>
    %c0_42 = arith.constant 0 : index
    %c0_43 = arith.constant 0 : index
    %65 = vector.load %arg11[%c0_42, %c0_43] : memref<1x256xf32, #tpu.memory_space<vmem>>, vector<1x256xf32>
    %66 = vector.broadcast %65 : vector<1x256xf32> to vector<8x256xf32>
    %67 = arith.addf %64, %66 : vector<8x256xf32>
    %68 = arith.truncf %67 : vector<8x256xf32> to vector<8x256xbf16>
    %cst_44 = arith.constant 0.000000e+00 : bf16
    %69 = vector.broadcast %cst_44 : bf16 to vector<8x256xbf16>
    %70 = arith.cmpf oge, %68, %69 : vector<8x256xbf16>
    %cst_45 = arith.constant 5.000000e-01 : bf16
    %71 = vector.broadcast %cst_45 : bf16 to vector<8x256xbf16>
    %72 = arith.mulf %71, %68 : vector<8x256xbf16>
    %73 = arith.select %70, %68, %72 : vector<8x256xi1>, vector<8x256xbf16>
    %c0_46 = arith.constant 0 : index
    %c0_47 = arith.constant 0 : index
    %74 = vector.load %arg12[%c0_46, %c0_47] : memref<256x128xbf16, #tpu.memory_space<vmem>>, vector<256x128xbf16>
    %cst_48 = arith.constant dense<0.000000e+00> : vector<8x128xf32>
    %75 = tpu.matmul %73, %74, %cst_48 {dimension_numbers = #tpu.dot_dimension_numbers<[1], [0], [0], [1], [0, 0, 1, 1], [], []>} : vector<8x256xbf16>, vector<256x128xbf16>, vector<8x128xf32> -> vector<8x128xf32>
    %c0_49 = arith.constant 0 : index
    %c0_50 = arith.constant 0 : index
    %76 = vector.load %arg13[%c0_49, %c0_50] : memref<1x128xf32, #tpu.memory_space<vmem>>, vector<1x128xf32>
    %77 = vector.broadcast %76 : vector<1x128xf32> to vector<8x128xf32>
    %78 = arith.addf %75, %77 : vector<8x128xf32>
    %c0_51 = arith.constant 0 : index
    %c0_52 = arith.constant 0 : index
    %79 = vector.load %arg14[%c0_51, %c0_52] : memref<256x128xbf16, #tpu.memory_space<vmem>>, vector<256x128xbf16>
    %cst_53 = arith.constant dense<0.000000e+00> : vector<8x128xf32>
    %80 = tpu.matmul %73, %79, %cst_53 {dimension_numbers = #tpu.dot_dimension_numbers<[1], [0], [0], [1], [0, 0, 1, 1], [], []>} : vector<8x256xbf16>, vector<256x128xbf16>, vector<8x128xf32> -> vector<8x128xf32>
    %c0_54 = arith.constant 0 : index
    %c0_55 = arith.constant 0 : index
    %81 = vector.load %arg15[%c0_54, %c0_55] : memref<1x128xf32, #tpu.memory_space<vmem>>, vector<1x128xf32>
    %82 = vector.broadcast %81 : vector<1x128xf32> to vector<8x128xf32>
    %83 = arith.addf %80, %82 : vector<8x128xf32>
    %84 = arith.maximumf %78, %83 : vector<8x128xf32>
    %85 = math.tanh %84 : vector<8x128xf32>
    %c0_56 = arith.constant 0 : index
    %c0_57 = arith.constant 0 : index
    %86 = vector.load %arg16[%c0_56, %c0_57] : memref<8x128xf32, #tpu.memory_space<vmem>>, vector<8x128xf32>
    tpu.vector_store %arg16[%c0_56, %c0_57], %85 {strides = array<i32>} : memref<8x128xf32, #tpu.memory_space<vmem>>, vector<8x128xf32>,
    return
  }
  func.func @transform_0(%arg0: i32) -> i32 {
    %c0_i32 = arith.constant 0 : i32
    %c0_i32_0 = arith.constant 0 : i32
    return %c0_i32 : i32
  }
  func.func @transform_1(%arg0: i32) -> (i32, i32) {
    %c0_i32 = arith.constant 0 : i32
    %c0_i32_0 = arith.constant 0 : i32
    return %arg0, %c0_i32 : i32, i32
  }
  func.func @transform_2(%arg0: i32) -> (i32, i32) {
    %c0_i32 = arith.constant 0 : i32
    %c0_i32_0 = arith.constant 0 : i32
    %c0_i32_1 = arith.constant 0 : i32
    return %c0_i32, %c0_i32_0 : i32, i32
  }
  func.func @transform_3(%arg0: i32) -> (i32, i32) {
    %c0_i32 = arith.constant 0 : i32
    %c0_i32_0 = arith.constant 0 : i32
    %c0_i32_1 = arith.constant 0 : i32
    return %c0_i32, %c0_i32_0 : i32, i32
  }
  func.func @transform_4(%arg0: i32) -> (i32, i32) {
    %c0_i32 = arith.constant 0 : i32
    %c0_i32_0 = arith.constant 0 : i32
    %c0_i32_1 = arith.constant 0 : i32
    return %c0_i32, %c0_i32_0 : i32, i32
  }
  func.func @transform_5(%arg0: i32) -> (i32, i32) {
    %c0_i32 = arith.constant 0 : i32
    %c0_i32_0 = arith.constant 0 : i32
    %c0_i32_1 = arith.constant 0 : i32
    return %c0_i32, %c0_i32_0 : i32, i32
  }
  func.func @transform_6(%arg0: i32) -> (i32, i32) {
    %c0_i32 = arith.constant 0 : i32
    %c0_i32_0 = arith.constant 0 : i32
    %c0_i32_1 = arith.constant 0 : i32
    return %c0_i32, %c0_i32_0 : i32, i32
  }
  func.func @transform_7(%arg0: i32) -> (i32, i32) {
    %c0_i32 = arith.constant 0 : i32
    %c0_i32_0 = arith.constant 0 : i32
    %c0_i32_1 = arith.constant 0 : i32
    return %c0_i32, %c0_i32_0 : i32, i32
  }
  func.func @transform_8(%arg0: i32) -> (i32, i32) {
    %c0_i32 = arith.constant 0 : i32
    %c0_i32_0 = arith.constant 0 : i32
    %c0_i32_1 = arith.constant 0 : i32
    return %c0_i32, %c0_i32_0 : i32, i32
  }
  func.func @transform_9(%arg0: i32) -> (i32, i32) {
    %c0_i32 = arith.constant 0 : i32
    %c0_i32_0 = arith.constant 0 : i32
    %c0_i32_1 = arith.constant 0 : i32
    return %c0_i32, %c0_i32_0 : i32, i32
  }
  func.func @transform_10(%arg0: i32) -> (i32, i32) {
    %c0_i32 = arith.constant 0 : i32
    %c0_i32_0 = arith.constant 0 : i32
    %c0_i32_1 = arith.constant 0 : i32
    return %c0_i32, %c0_i32_0 : i32, i32
  }
  func.func @transform_11(%arg0: i32) -> (i32, i32) {
    %c0_i32 = arith.constant 0 : i32
    %c0_i32_0 = arith.constant 0 : i32
    %c0_i32_1 = arith.constant 0 : i32
    return %c0_i32, %c0_i32_0 : i32, i32
  }
  func.func @transform_12(%arg0: i32) -> (i32, i32) {
    %c0_i32 = arith.constant 0 : i32
    %c0_i32_0 = arith.constant 0 : i32
    %c0_i32_1 = arith.constant 0 : i32
    return %c0_i32, %c0_i32_0 : i32, i32
  }
  func.func @transform_13(%arg0: i32) -> (i32, i32) {
    %c0_i32 = arith.constant 0 : i32
    %c0_i32_0 = arith.constant 0 : i32
    %c0_i32_1 = arith.constant 0 : i32
    return %c0_i32, %c0_i32_0 : i32, i32
  }
  func.func @transform_14(%arg0: i32) -> (i32, i32) {
    %c0_i32 = arith.constant 0 : i32
    %c0_i32_0 = arith.constant 0 : i32
    %c0_i32_1 = arith.constant 0 : i32
    return %c0_i32, %c0_i32_0 : i32, i32
  }
  func.func @transform_15(%arg0: i32) -> (i32, i32) {
    %c0_i32 = arith.constant 0 : i32
    %c0_i32_0 = arith.constant 0 : i32
    return %arg0, %c0_i32 : i32, i32
  }
}

</mosaic_0001>

<llo_original>
// kernel: tpu_custom_call.1
$region0: #{tpu_custom_call.1}
  #allocation0 [shape = 'u32[]', space=smem, size = 0x4, offset = 0x4, fixed_abs, tag = 'smem constant byte address 0x4 - core index']
  #allocation1 [shape = 'u32[144,128]{1,0:T(1,128)}', space=vmem, size = 0x12000, scoped, tag = 'internal scratch']
  %s0 = inlined_call_operand.hbm [shape: f32[4], index: 0, kind: input, shape index: {}]
  %s1 = inlined_call_operand.hbm [shape: f32[8,128], index: 1, kind: input, shape index: {}]
  %s2 = inlined_call_operand.hbm [shape: bf16[128,128], index: 2, kind: input, shape index: {}]
  %s3 = inlined_call_operand.hbm [shape: bf16[128,256], index: 3, kind: input, shape index: {}]
  %s4 = inlined_call_operand.vmem [shape: f32[1,256], index: 4, kind: input, shape index: {}]
  %s5 = inlined_call_operand.hbm [shape: bf16[256,512], index: 5, kind: input, shape index: {}]
  %s6 = inlined_call_operand.vmem [shape: f32[1,512], index: 6, kind: input, shape index: {}]
  %s7 = inlined_call_operand.hbm [shape: bf16[256,512], index: 7, kind: input, shape index: {}]
  %s8 = inlined_call_operand.vmem [shape: f32[1,512], index: 8, kind: input, shape index: {}]
  %s9 = inlined_call_operand.hbm [shape: bf16[512,256], index: 9, kind: input, shape index: {}]
  %s10 = inlined_call_operand.vmem [shape: f32[1,256], index: 10, kind: input, shape index: {}]
  %s11 = inlined_call_operand.hbm [shape: bf16[256,128], index: 11, kind: input, shape index: {}]
  %s12 = inlined_call_operand.vmem [shape: f32[1,128], index: 12, kind: input, shape index: {}]
  %s13 = inlined_call_operand.hbm [shape: bf16[256,128], index: 13, kind: input, shape index: {}]
  %s14 = inlined_call_operand.vmem [shape: f32[1,128], index: 14, kind: input, shape index: {}]
  %s15 = inlined_call_operand.hbm [shape: f32[8,128], index: 15, kind: output, shape index: {}]
  %s16 = sld [smem:[#allocation0]]
  $region106: #{tpu_custom_call.1} parent=0
    _
  %s18 = ssub.s32 1, %s16
  %s19 = scalar_select 0, %s18, %s16
  $region1: #{tpu_custom_call.1} parent=0
    #allocation2 [shape = 'u8[512]{0}', space=smem, size = 0x200, scoped, tag = 'input window, operand 0, single buffered']
    #allocation3 [shape = 's32[1]{0}', space=sflag, size = 0x4, scoped, tag = 'scoped memory for tpu_custom_call.1']
    #allocation4 [shape = 's32[1]{0}', space=sflag, size = 0x4, scoped, tag = 'scoped memory for tpu_custom_call.1']
    #allocation5 [shape = 's32[1]{0}', space=sflag, size = 0x4, scoped, tag = 'scoped memory for tpu_custom_call.1']
    #allocation6 [shape = 'u8[4096]{0}', space=vmem, size = 0x1000, scoped, tag = 'input window, operand 1, single buffered']
    #allocation7 [shape = 'u8[32768]{0}', space=vmem, size = 0x8000, scoped, tag = 'input window, operand 2, single buffered']
    #allocation8 [shape = 's32[1]{0}', space=sflag, size = 0x4, scoped, tag = 'scoped memory for tpu_custom_call.1']
    #allocation9 [shape = 'u8[65536]{0}', space=vmem, size = 0x10000, scoped, tag = 'input window, operand 3, single buffered']
    #allocation10 [shape = 'u8[262144]{0}', space=vmem, size = 0x40000, scoped, tag = 'input window, operand 5, single buffered']
    #allocation11 [shape = 's32[1]{0}', space=sflag, size = 0x4, scoped, tag = 'scoped memory for tpu_custom_call.1']
    #allocation12 [shape = 'u8[262144]{0}', space=vmem, size = 0x40000, scoped, tag = 'input window, operand 7, single buffered']
    #allocation13 [shape = 'u8[262144]{0}', space=vmem, size = 0x40000, scoped, tag = 'input window, operand 9, single buffered']
    #allocation14 [shape = 's32[1]{0}', space=sflag, size = 0x4, scoped, tag = 'scoped memory for tpu_custom_call.1']
    #allocation15 [shape = 'u8[65536]{0}', space=vmem, size = 0x10000, scoped, tag = 'input window, operand 11, single buffered']
    #allocation16 [shape = 'u8[65536]{0}', space=vmem, size = 0x10000, scoped, tag = 'input window, operand 13, single buffered']
    #allocation17 [shape = 's32[1]{0}', space=sflag, size = 0x4, scoped, tag = 'scoped memory for tpu_custom_call.1']
    #allocation18 [shape = 'u8[4096]{0}', space=vmem, size = 0x1000, scoped, tag = 'output window, operand 0, single buffered']
    %20 = vsyncpa [#allocation5], 0
    %21 = vsyncpa [#allocation3], 0
    %22 = vsyncpa [#allocation8], 0
    %23 = vsyncpa [#allocation11], 0
    %24 = vsyncpa [#allocation14], 0
    %25 = vsyncpa [#allocation17], 0
    %26 = vsyncpa [#allocation4], 0
    // Predicated region
    $region2: #{tpu_custom_call.1} parent=1 // pred_check
      _
    $region3: #{tpu_custom_call.1} parent=1 // pred_check_branch
      %28 = sbr.rel (0) target = $region5
    $region4: #{tpu_custom_call.1} parent=1 // pred_region
      %s30 = ssub.s32 16, 16
      %31 = vsyncadd [#allocation5], %s30
      %34 = dma.hbm_to_smem %s0, 16, [#allocation2], [#allocation5]
    $region5: #{tpu_custom_call.1} parent=1 // pred_fallthru
      _
    // Predicated region
    $region6: #{tpu_custom_call.1} parent=1 // pred_check
      _
    $region7: #{tpu_custom_call.1} parent=1 // pred_check_branch
      %36 = sbr.rel (0) target = $region9
    $region8: #{tpu_custom_call.1} parent=1 // pred_region
      %s38 = ssub.s32 128, 128
      %39 = vsyncadd [#allocation3], %s38
      %s41 = sshll.u32 [#allocation6], 4
      %s42 = int_to_ptr.vmem [resolvable:$true] %s41
      %44 = dma.hbm_to_vmem [thread:$0]  %s1, 128, %s42, [#allocation3]
    $region9: #{tpu_custom_call.1} parent=1 // pred_fallthru
      _
    // Predicated region
    $region10: #{tpu_custom_call.1} parent=1 // pred_check
      _
    $region11: #{tpu_custom_call.1} parent=1 // pred_check_branch
      %46 = sbr.rel (0) target = $region13
    $region12: #{tpu_custom_call.1} parent=1 // pred_region
      %s48 = ssub.s32 1024, 1024
      %49 = vsyncadd [#allocation8], %s48
      %s50 = sshll.u32 [#allocation7], 4
      %s51 = int_to_ptr.vmem [resolvable:$true] %s50
      %56 = dma.hbm_to_vmem [thread:$0]  %s2, 1024, %s51, [#allocation8], 64, 64, 4
    $region13: #{tpu_custom_call.1} parent=1 // pred_fallthru
      _
    // Predicated region
    $region14: #{tpu_custom_call.1} parent=1 // pred_check
      _
    $region15: #{tpu_custom_call.1} parent=1 // pred_check_branch
      %58 = sbr.rel (0) target = $region17
    $region16: #{tpu_custom_call.1} parent=1 // pred_region
      %s60 = ssub.s32 2048, 2048
      %61 = vsyncadd [#allocation8], %s60
      %s62 = sshll.u32 [#allocation9], 4
      %s63 = int_to_ptr.vmem [resolvable:$true] %s62
      %68 = dma.hbm_to_vmem [thread:$0]  %s3, 2048, %s63, [#allocation8], 128, 128, 8
    $region17: #{tpu_custom_call.1} parent=1 // pred_fallthru
      _
    // Predicated region
    $region18: #{tpu_custom_call.1} parent=1 // pred_check
      _
    $region19: #{tpu_custom_call.1} parent=1 // pred_check_branch
      %70 = sbr.rel (0) target = $region21
    $region20: #{tpu_custom_call.1} parent=1 // pred_region
      _
    $region21: #{tpu_custom_call.1} parent=1 // pred_fallthru
      _
    // Predicated region
    $region22: #{tpu_custom_call.1} parent=1 // pred_check
      _
    $region23: #{tpu_custom_call.1} parent=1 // pred_check_branch
      %72 = sbr.rel (0) target = $region25
    $region24: #{tpu_custom_call.1} parent=1 // pred_region
      %s74 = ssub.s32 8192, 8192
      %75 = vsyncadd [#allocation11], %s74
      %s76 = sshll.u32 [#allocation10], 4
      %s77 = int_to_ptr.vmem [resolvable:$true] %s76
      %82 = dma.hbm_to_vmem [thread:$0]  %s5, 8192, %s77, [#allocation11], 256, 256, 16
    $region25: #{tpu_custom_call.1} parent=1 // pred_fallthru
      _
    // Predicated region
    $region26: #{tpu_custom_call.1} parent=1 // pred_check
      _
    $region27: #{tpu_custom_call.1} parent=1 // pred_check_branch
      %84 = sbr.rel (0) target = $region29
    $region28: #{tpu_custom_call.1} parent=1 // pred_region
      _
    $region29: #{tpu_custom_call.1} parent=1 // pred_fallthru
      _
    // Predicated region
    $region30: #{tpu_custom_call.1} parent=1 // pred_check
      _
    $region31: #{tpu_custom_call.1} parent=1 // pred_check_branch
      %86 = sbr.rel (0) target = $region33
    $region32: #{tpu_custom_call.1} parent=1 // pred_region
      %s88 = ssub.s32 8192, 8192
      %89 = vsyncadd [#allocation11], %s88
      %s90 = sshll.u32 [#allocation12], 4
      %s91 = int_to_ptr.vmem [resolvable:$true] %s90
      %96 = dma.hbm_to_vmem [thread:$0]  %s7, 8192, %s91, [#allocation11], 256, 256, 16
    $region33: #{tpu_custom_call.1} parent=1 // pred_fallthru
      _
    // Predicated region
    $region34: #{tpu_custom_call.1} parent=1 // pred_check
      _
    $region35: #{tpu_custom_call.1} parent=1 // pred_check_branch
      %98 = sbr.rel (0) target = $region37
    $region36: #{tpu_custom_call.1} parent=1 // pred_region
      _
    $region37: #{tpu_custom_call.1} parent=1 // pred_fallthru
      _
    // Predicated region
    $region38: #{tpu_custom_call.1} parent=1 // pred_check
      _
    $region39: #{tpu_custom_call.1} parent=1 // pred_check_branch
      %100 = sbr.rel (0) target = $region41
    $region40: #{tpu_custom_call.1} parent=1 // pred_region
      %s102 = ssub.s32 8192, 8192
      %103 = vsyncadd [#allocation14], %s102
      %s104 = sshll.u32 [#allocation13], 4
      %s105 = int_to_ptr.vmem [resolvable:$true] %s104
      %110 = dma.hbm_to_vmem [thread:$0]  %s9, 8192, %s105, [#allocation14], 128, 128, 8
    $region41: #{tpu_custom_call.1} parent=1 // pred_fallthru
      _
    // Predicated region
    $region42: #{tpu_custom_call.1} parent=1 // pred_check
      _
    $region43: #{tpu_custom_call.1} parent=1 // pred_check_branch
      %112 = sbr.rel (0) target = $region45
    $region44: #{tpu_custom_call.1} parent=1 // pred_region
      _
    $region45: #{tpu_custom_call.1} parent=1 // pred_fallthru
      _
    // Predicated region
    $region46: #{tpu_custom_call.1} parent=1 // pred_check
      _
    $region47: #{tpu_custom_call.1} parent=1 // pred_check_branch
      %114 = sbr.rel (0) target = $region49
    $region48: #{tpu_custom_call.1} parent=1 // pred_region
      %s116 = ssub.s32 2048, 2048
      %117 = vsyncadd [#allocation14], %s116
      %s118 = sshll.u32 [#allocation15], 4
      %s119 = int_to_ptr.vmem [resolvable:$true] %s118
      %124 = dma.hbm_to_vmem [thread:$0]  %s11, 2048, %s119, [#allocation14], 64, 64, 4
    $region49: #{tpu_custom_call.1} parent=1 // pred_fallthru
      _
    // Predicated region
    $region50: #{tpu_custom_call.1} parent=1 // pred_check
      _
    $region51: #{tpu_custom_call.1} parent=1 // pred_check_branch
      %126 = sbr.rel (0) target = $region53
    $region52: #{tpu_custom_call.1} parent=1 // pred_region
      _
    $region53: #{tpu_custom_call.1} parent=1 // pred_fallthru
      _
    // Predicated region
    $region54: #{tpu_custom_call.1} parent=1 // pred_check
      _
    $region55: #{tpu_custom_call.1} parent=1 // pred_check_branch
      %128 = sbr.rel (0) target = $region57
    $region56: #{tpu_custom_call.1} parent=1 // pred_region
      %s130 = ssub.s32 2048, 2048
      %131 = vsyncadd [#allocation17], %s130
      %s132 = sshll.u32 [#allocation16], 4
      %s133 = int_to_ptr.vmem [resolvable:$true] %s132
      %138 = dma.hbm_to_vmem [thread:$0]  %s13, 2048, %s133, [#allocation17], 64, 64, 4
    $region57: #{tpu_custom_call.1} parent=1 // pred_fallthru
      _
    // Predicated region
    $region58: #{tpu_custom_call.1} parent=1 // pred_check
      _
    $region59: #{tpu_custom_call.1} parent=1 // pred_check_branch
      %140 = sbr.rel (0) target = $region61
    $region60: #{tpu_custom_call.1} parent=1 // pred_region
      _
    $region61: #{tpu_custom_call.1} parent=1 // pred_fallthru
      _
    // Predicated region
    $region62: #{tpu_custom_call.1} parent=1 // pred_check
      _
    $region63: #{tpu_custom_call.1} parent=1 // pred_check_branch
      %142 = sbr.rel (0) target = $region65
    $region64: #{tpu_custom_call.1} parent=1 // pred_region
      %143 = dma.done [#allocation5], 16
    $region65: #{tpu_custom_call.1} parent=1 // pred_fallthru
      _
    // Predicated region
    $region66: #{tpu_custom_call.1} parent=1 // pred_check
      _
    $region67: #{tpu_custom_call.1} parent=1 // pred_check_branch
      %145 = sbr.rel (0) target = $region69
    $region68: #{tpu_custom_call.1} parent=1 // pred_region
      %146 = dma.done [#allocation3], 128
    $region69: #{tpu_custom_call.1} parent=1 // pred_fallthru
      _
    // Predicated region
    $region70: #{tpu_custom_call.1} parent=1 // pred_check
      _
    $region71: #{tpu_custom_call.1} parent=1 // pred_check_branch
      %148 = sbr.rel (0) target = $region73
    $region72: #{tpu_custom_call.1} parent=1 // pred_region
      %149 = dma.done [#allocation8], 1024
    $region73: #{tpu_custom_call.1} parent=1 // pred_fallthru
      _
    // Predicated region
    $region74: #{tpu_custom_call.1} parent=1 // pred_check
      _
    $region75: #{tpu_custom_call.1} parent=1 // pred_check_branch
      %151 = sbr.rel (0) target = $region77
    $region76: #{tpu_custom_call.1} parent=1 // pred_region
      %152 = dma.done [#allocation8], 2048
    $region77: #{tpu_custom_call.1} parent=1 // pred_fallthru
      _
    // Predicated region
    $region78: #{tpu_custom_call.1} parent=1 // pred_check
      _
    $region79: #{tpu_custom_call.1} parent=1 // pred_check_branch
      %154 = sbr.rel (0) target = $region81
    $region80: #{tpu_custom_call.1} parent=1 // pred_region
      %155 = dma.done [#allocation11], 8192
    $region81: #{tpu_custom_call.1} parent=1 // pred_fallthru
      _
    // Predicated region
    $region82: #{tpu_custom_call.1} parent=1 // pred_check
      _
    $region83: #{tpu_custom_call.1} parent=1 // pred_check_branch
      %157 = sbr.rel (0) target = $region85
    $region84: #{tpu_custom_call.1} parent=1 // pred_region
      %158 = dma.done [#allocation11], 8192
    $region85: #{tpu_custom_call.1} parent=1 // pred_fallthru
      _
    // Predicated region
    $region86: #{tpu_custom_call.1} parent=1 // pred_check
      _
    $region87: #{tpu_custom_call.1} parent=1 // pred_check_branch
      %160 = sbr.rel (0) target = $region89
    $region88: #{tpu_custom_call.1} parent=1 // pred_region
      %161 = dma.done [#allocation14], 8192
    $region89: #{tpu_custom_call.1} parent=1 // pred_fallthru
      _
    // Predicated region
    $region90: #{tpu_custom_call.1} parent=1 // pred_check
      _
    $region91: #{tpu_custom_call.1} parent=1 // pred_check_branch
      %163 = sbr.rel (0) target = $region93
    $region92: #{tpu_custom_call.1} parent=1 // pred_region
      %164 = dma.done [#allocation14], 2048
    $region93: #{tpu_custom_call.1} parent=1 // pred_fallthru
      _
    // Predicated region
    $region94: #{tpu_custom_call.1} parent=1 // pred_check
      _
    $region95: #{tpu_custom_call.1} parent=1 // pred_check_branch
      %166 = sbr.rel (0) target = $region97
    $region96: #{tpu_custom_call.1} parent=1 // pred_region
      %167 = dma.done [#allocation17], 2048
    $region97: #{tpu_custom_call.1} parent=1 // pred_fallthru
      _
    %168 = sfence
    %v172 = vld [vmem:[#allocation6] sm:$0xff]
    %s173 = sld [smem:[#allocation2 + $0x3]]
    %v174 = vpack.c.bf16 %v172, %v172
    %v175 = vld [vmem:[#allocation7] sm:$0xf]
    %v176 = vld [vmem:[#allocation7 + $0x4] sm:$0xf]
    %v177 = vld [vmem:[#allocation7 + $0x8] sm:$0xf]
    %v178 = vld [vmem:[#allocation7 + $0xc] sm:$0xf]
    %v179 = vld [vmem:[#allocation7 + $0x10] sm:$0xf]
    %v180 = vld [vmem:[#allocation7 + $0x14] sm:$0xf]
    %v181 = vld [vmem:[#allocation7 + $0x18] sm:$0xf]
    %v182 = vld [vmem:[#allocation7 + $0x1c] sm:$0xf]
    %v183 = vld [vmem:[#allocation7 + $0x20] sm:$0xf]
    %v184 = vld [vmem:[#allocation7 + $0x24] sm:$0xf]
    %v185 = vld [vmem:[#allocation7 + $0x28] sm:$0xf]
    %v186 = vld [vmem:[#allocation7 + $0x2c] sm:$0xf]
    %v187 = vld [vmem:[#allocation7 + $0x30] sm:$0xf]
    %v188 = vld [vmem:[#allocation7 + $0x34] sm:$0xf]
    %v189 = vld [vmem:[#allocation7 + $0x38] sm:$0xf]
    %v190 = vld [vmem:[#allocation7 + $0x3c] sm:$0xf]
    %v191 = vstv %s173
    %v208 = vunpack.c.l.b16 %v175
    %v209 = vunpack.c.l.b16 %v176
    %v210 = vunpack.c.l.b16 %v177
    %v211 = vunpack.c.l.b16 %v178
    %v212 = vunpack.c.l.b16 %v179
    %v213 = vunpack.c.l.b16 %v180
    %v214 = vunpack.c.l.b16 %v181
    %v215 = vunpack.c.l.b16 %v182
    %v216 = vunpack.c.l.b16 %v183
    %v217 = vunpack.c.l.b16 %v184
    %v218 = vunpack.c.l.b16 %v185
    %v219 = vunpack.c.l.b16 %v186
    %v220 = vunpack.c.l.b16 %v187
    %v221 = vunpack.c.l.b16 %v188
    %v222 = vunpack.c.l.b16 %v189
    %v223 = vunpack.c.l.b16 %v190
    %v224 = vpack.c.b16 %v209, %v208
    %v225 = vpack.c.b16 %v211, %v210
    %v226 = vpack.c.b16 %v213, %v212
    %v227 = vpack.c.b16 %v215, %v214
    %v228 = vpack.c.b16 %v217, %v216
    %v229 = vpack.c.b16 %v219, %v218
    %v230 = vpack.c.b16 %v221, %v220
    %v231 = vpack.c.b16 %v223, %v222
    %240 = vmatprep.subr.bf16.mxu0 0
    %241 = vmatpush1.bf16.msra.mxu0 %v224
    %242 = vmatprep.subr.bf16.mxu0 0
    %243 = vmatpush1.bf16.msra.mxu0 %v225
    %244 = vmatprep.subr.bf16.mxu0 0
    %245 = vmatpush1.bf16.msra.mxu0 %v226
    %246 = vmatprep.subr.bf16.mxu0 0
    %247 = vmatpush1.bf16.msra.mxu0 %v227
    %248 = vmatprep.subr.bf16.mxu0 0
    %249 = vmatpush1.bf16.msra.mxu0 %v228
    %250 = vmatprep.subr.bf16.mxu0 0
    %251 = vmatpush1.bf16.msra.mxu0 %v229
    %252 = vmatprep.subr.bf16.mxu0 0
    %253 = vmatpush1.bf16.msra.mxu0 %v230
    %254 = vmatprep.subr.bf16.mxu0 0
    %255 = vmatpush1.bf16.msra.mxu0 %v231
    %256 = vmatprep.subr.bf16.mxu0 0
    %257 = vmatpush1.bf16.msra.mxu0 0
    %258 = vmatprep.subr.bf16.mxu0 0
    %259 = vmatpush1.bf16.msra.mxu0 0
    %260 = vmatprep.subr.bf16.mxu0 0
    %261 = vmatpush1.bf16.msra.mxu0 0
    %262 = vmatprep.subr.bf16.mxu0 0
    %263 = vmatpush1.bf16.msra.mxu0 0
    %264 = vmatprep.subr.bf16.mxu0 0
    %265 = vmatpush1.bf16.msra.mxu0 0
    %266 = vmatprep.subr.bf16.mxu0 0
    %267 = vmatpush1.bf16.msra.mxu0 0
    %268 = vmatprep.subr.bf16.mxu0 0
    %269 = vmatpush1.bf16.msra.mxu0 0
    %270 = vmatprep.subr.bf16.mxu0 0
    %271 = vmatpush1.bf16.msra.mxu0 0
    %272 = vmatprep.mubr.bf16.mxu0 0
    %273 = vmatmul.mubr.bf16.gmra.mrb[0].mxu0 %v174
    %v274 = vpop.f32.mrb[0].mxu0
    %v275 = vadd.f32 %v191, %v274
    %v276 = vpop.f32.mrb[0].mxu0
    %v277 = vpop.f32.mrb[0].mxu0
    %v278 = vpop.f32.mrb[0].mxu0
    %279 = vdwg.mxu0
    %v280 = vpack.c.bf16 %v275, %v275
    %vm281 = vcmp.ge.bf16.partialorder %v280, 0
    %v282 = vmul.bf16 %v280, 1056980736
    %v283 = vsel %vm281, %v280, %v282
    %v284 = vld [vmem:[#allocation9] sm:$0xff]
    %v285 = vld [vmem:[#allocation9 + $0x8] sm:$0xff]
    %v286 = vld [vmem:[#allocation9 + $0x10] sm:$0xff]
    %v287 = vld [vmem:[#allocation9 + $0x18] sm:$0xff]
    %v288 = vld [vmem:[#allocation9 + $0x20] sm:$0xff]
    %v289 = vld [vmem:[#allocation9 + $0x28] sm:$0xff]
    %v290 = vld [vmem:[#allocation9 + $0x30] sm:$0xff]
    %v291 = vld [vmem:[#allocation9 + $0x38] sm:$0xff]
    %v292 = vld [vmem:[#allocation9 + $0x40] sm:$0xff]
    %v293 = vld [vmem:[#allocation9 + $0x48] sm:$0xff]
    %v294 = vld [vmem:[#allocation9 + $0x50] sm:$0xff]
    %v295 = vld [vmem:[#allocation9 + $0x58] sm:$0xff]
    %v296 = vld [vmem:[#allocation9 + $0x60] sm:$0xff]
    %v297 = vld [vmem:[#allocation9 + $0x68] sm:$0xff]
    %v298 = vld [vmem:[#allocation9 + $0x70] sm:$0xff]
    %v299 = vld [vmem:[#allocation9 + $0x78] sm:$0xff]
    %v300 = vld [vmem:[%s4] sm:$0x3]
    %v302 = vlaneseq
    %v303 = vshrl.u32 %v302, 7
    %v304 = vsub.s32 0, %v303
    %v305 = vrot.slane %v300, %v304
    %v306 = vlaneseq
    %v307 = vshrl.u32 %v306, 7
    %v308 = vsub.s32 1, %v307
    %v309 = vrot.slane %v300, %v308
    %v328 = vunpack.c.l.b16 %v284
    %v329 = vunpack.c.h.b16 %v284
    %v330 = vunpack.c.l.b16 %v285
    %v331 = vunpack.c.h.b16 %v285
    %v332 = vunpack.c.l.b16 %v286
    %v333 = vunpack.c.h.b16 %v286
    %v334 = vunpack.c.l.b16 %v287
    %v335 = vunpack.c.h.b16 %v287
    %v336 = vunpack.c.l.b16 %v288
    %v337 = vunpack.c.h.b16 %v288
    %v338 = vunpack.c.l.b16 %v289
    %v339 = vunpack.c.h.b16 %v289
    %v340 = vunpack.c.l.b16 %v290
    %v341 = vunpack.c.h.b16 %v290
    %v342 = vunpack.c.l.b16 %v291
    %v343 = vunpack.c.h.b16 %v291
    %v344 = vunpack.c.l.b16 %v292
    %v345 = vunpack.c.h.b16 %v292
    %v346 = vunpack.c.l.b16 %v293
    %v347 = vunpack.c.h.b16 %v293
    %v348 = vunpack.c.l.b16 %v294
    %v349 = vunpack.c.h.b16 %v294
    %v350 = vunpack.c.l.b16 %v295
    %v351 = vunpack.c.h.b16 %v295
    %v352 = vunpack.c.l.b16 %v296
    %v353 = vunpack.c.h.b16 %v296
    %v354 = vunpack.c.l.b16 %v297
    %v355 = vunpack.c.h.b16 %v297
    %v356 = vunpack.c.l.b16 %v298
    %v357 = vunpack.c.h.b16 %v298
    %v358 = vunpack.c.l.b16 %v299
    %v359 = vunpack.c.h.b16 %v299
    %v360 = vpack.c.b16 %v330, %v328
    %v361 = vpack.c.b16 %v331, %v329
    %v362 = vpack.c.b16 %v334, %v332
    %v363 = vpack.c.b16 %v335, %v333
    %v364 = vpack.c.b16 %v338, %v336
    %v365 = vpack.c.b16 %v339, %v337
    %v366 = vpack.c.b16 %v342, %v340
    %v367 = vpack.c.b16 %v343, %v341
    %v368 = vpack.c.b16 %v346, %v344
    %v369 = vpack.c.b16 %v347, %v345
    %v370 = vpack.c.b16 %v350, %v348
    %v371 = vpack.c.b16 %v351, %v349
    %v372 = vpack.c.b16 %v354, %v352
    %v373 = vpack.c.b16 %v355, %v353
    %v374 = vpack.c.b16 %v358, %v356
    %v375 = vpack.c.b16 %v359, %v357
    %392 = vmatprep.subr.bf16.mxu0 %v361
    %393 = vmatpush1.bf16.msra.mxu0 %v360
    %394 = vmatprep.subr.bf16.mxu0 %v363
    %395 = vmatpush1.bf16.msra.mxu0 %v362
    %396 = vmatprep.subr.bf16.mxu0 %v365
    %397 = vmatpush1.bf16.msra.mxu0 %v364
    %398 = vmatprep.subr.bf16.mxu0 %v367
    %399 = vmatpush1.bf16.msra.mxu0 %v366
    %400 = vmatprep.subr.bf16.mxu0 %v369
    %401 = vmatpush1.bf16.msra.mxu0 %v368
    %402 = vmatprep.subr.bf16.mxu0 %v371
    %403 = vmatpush1.bf16.msra.mxu0 %v370
    %404 = vmatprep.subr.bf16.mxu0 %v373
    %405 = vmatpush1.bf16.msra.mxu0 %v372
    %406 = vmatprep.subr.bf16.mxu0 %v375
    %407 = vmatpush1.bf16.msra.mxu0 %v374
    %408 = vmatprep.subr.bf16.mxu0 0
    %409 = vmatpush1.bf16.msra.mxu0 0
    %410 = vmatprep.subr.bf16.mxu0 0
    %411 = vmatpush1.bf16.msra.mxu0 0
    %412 = vmatprep.subr.bf16.mxu0 0
    %413 = vmatpush1.bf16.msra.mxu0 0
    %414 = vmatprep.subr.bf16.mxu0 0
    %415 = vmatpush1.bf16.msra.mxu0 0
    %416 = vmatprep.subr.bf16.mxu0 0
    %417 = vmatpush1.bf16.msra.mxu0 0
    %418 = vmatprep.subr.bf16.mxu0 0
    %419 = vmatpush1.bf16.msra.mxu0 0
    %420 = vmatprep.subr.bf16.mxu0 0
    %421 = vmatpush1.bf16.msra.mxu0 0
    %422 = vmatprep.subr.bf16.mxu0 0
    %423 = vmatpush1.bf16.msra.mxu0 0
    %424 = vmatprep.mubr.bf16.mxu0 0
    %425 = vmatmul.mubr.bf16.gmra.mrb[0].mxu0 %v283
    %v426 = vpop.f32.mrb[0].mxu0
    %v427 = vadd.f32 %v305, %v426
    %v428 = vpop.f32.mrb[0].mxu0
    %v429 = vadd.f32 %v309, %v428
    %v430 = vpop.f32.mrb[0].mxu0
    %v431 = vpop.f32.mrb[0].mxu0
    %432 = vdwg.mxu0
    %v433 = vpack.c.bf16 %v427, %v427
    %v434 = vpack.c.bf16 %v429, %v429
    %vm435 = vcmp.ge.bf16.partialorder %v433, 0
    %vm436 = vcmp.ge.bf16.partialorder %v434, 0
    %v437 = vmul.bf16 %v433, 1056980736
    %v438 = vmul.bf16 %v434, 1056980736
    %v439 = vsel %vm435, %v433, %v437
    %v440 = vsel %vm436, %v434, %v438
    %v441 = vld [vmem:[#allocation10] sm:$0xff]
    %v442 = vld [vmem:[#allocation10 + $0x10] sm:$0xff]
    %v443 = vld [vmem:[#allocation10 + $0x20] sm:$0xff]
    %v444 = vld [vmem:[#allocation10 + $0x30] sm:$0xff]
    %v445 = vld [vmem:[#allocation10 + $0x40] sm:$0xff]
    %v446 = vld [vmem:[#allocation10 + $0x50] sm:$0xff]
    %v447 = vld [vmem:[#allocation10 + $0x60] sm:$0xff]
    %v448 = vld [vmem:[#allocation10 + $0x70] sm:$0xff]
    %v449 = vld [vmem:[#allocation10 + $0x80] sm:$0xff]
    %v450 = vld [vmem:[#allocation10 + $0x90] sm:$0xff]
    %v451 = vld [vmem:[#allocation10 + $0xa0] sm:$0xff]
    %v452 = vld [vmem:[#allocation10 + $0xb0] sm:$0xff]
    %v453 = vld [vmem:[#allocation10 + $0xc0] sm:$0xff]
    %v454 = vld [vmem:[#allocation10 + $0xd0] sm:$0xff]
    %v455 = vld [vmem:[#allocation10 + $0xe0] sm:$0xff]
    %v456 = vld [vmem:[#allocation10 + $0xf0] sm:$0xff]
    %v457 = vld [vmem:[#allocation10 + $0x100] sm:$0xff]
    %v458 = vld [vmem:[#allocation10 + $0x110] sm:$0xff]
    %v459 = vld [vmem:[#allocation10 + $0x120] sm:$0xff]
    %v460 = vld [vmem:[#allocation10 + $0x130] sm:$0xff]
    %v461 = vld [vmem:[#allocation10 + $0x140] sm:$0xff]
    %v462 = vld [vmem:[#allocation10 + $0x150] sm:$0xff]
    %v463 = vld [vmem:[#allocation10 + $0x160] sm:$0xff]
    %v464 = vld [vmem:[#allocation10 + $0x170] sm:$0xff]
    %v465 = vld [vmem:[#allocation10 + $0x180] sm:$0xff]
    %v466 = vld [vmem:[#allocation10 + $0x190] sm:$0xff]
    %v467 = vld [vmem:[#allocation10 + $0x1a0] sm:$0xff]
    %v468 = vld [vmem:[#allocation10 + $0x1b0] sm:$0xff]
    %v469 = vld [vmem:[#allocation10 + $0x1c0] sm:$0xff]
    %v470 = vld [vmem:[#allocation10 + $0x1d0] sm:$0xff]
    %v471 = vld [vmem:[#allocation10 + $0x1e0] sm:$0xff]
    %v472 = vld [vmem:[#allocation10 + $0x1f0] sm:$0xff]
    %v473 = vld [vmem:[%s6] sm:$0x3]
    %v475 = vlaneseq
    %v476 = vshrl.u32 %v475, 7
    %v477 = vsub.s32 0, %v476
    %v478 = vrot.slane %v473, %v477
    %v479 = vlaneseq
    %v480 = vshrl.u32 %v479, 7
    %v481 = vsub.s32 1, %v480
    %v482 = vrot.slane %v473, %v481
    %v517 = vunpack.c.l.b16 %v441
    %v518 = vunpack.c.h.b16 %v441
    %v519 = vunpack.c.l.b16 %v442
    %v520 = vunpack.c.h.b16 %v442
    %v521 = vunpack.c.l.b16 %v443
    %v522 = vunpack.c.h.b16 %v443
    %v523 = vunpack.c.l.b16 %v444
    %v524 = vunpack.c.h.b16 %v444
    %v525 = vunpack.c.l.b16 %v445
    %v526 = vunpack.c.h.b16 %v445
    %v527 = vunpack.c.l.b16 %v446
    %v528 = vunpack.c.h.b16 %v446
    %v529 = vunpack.c.l.b16 %v447
    %v530 = vunpack.c.h.b16 %v447
    %v531 = vunpack.c.l.b16 %v448
    %v532 = vunpack.c.h.b16 %v448
    %v533 = vunpack.c.l.b16 %v449
    %v534 = vunpack.c.h.b16 %v449
    %v535 = vunpack.c.l.b16 %v450
    %v536 = vunpack.c.h.b16 %v450
    %v537 = vunpack.c.l.b16 %v451
    %v538 = vunpack.c.h.b16 %v451
    %v539 = vunpack.c.l.b16 %v452
    %v540 = vunpack.c.h.b16 %v452
    %v541 = vunpack.c.l.b16 %v453
    %v542 = vunpack.c.h.b16 %v453
    %v543 = vunpack.c.l.b16 %v454
    %v544 = vunpack.c.h.b16 %v454
    %v545 = vunpack.c.l.b16 %v455
    %v546 = vunpack.c.h.b16 %v455
    %v547 = vunpack.c.l.b16 %v456
    %v548 = vunpack.c.h.b16 %v456
    %v549 = vunpack.c.l.b16 %v457
    %v550 = vunpack.c.h.b16 %v457
    %v551 = vunpack.c.l.b16 %v458
    %v552 = vunpack.c.h.b16 %v458
    %v553 = vunpack.c.l.b16 %v459
    %v554 = vunpack.c.h.b16 %v459
    %v555 = vunpack.c.l.b16 %v460
    %v556 = vunpack.c.h.b16 %v460
    %v557 = vunpack.c.l.b16 %v461
    %v558 = vunpack.c.h.b16 %v461
    %v559 = vunpack.c.l.b16 %v462
    %v560 = vunpack.c.h.b16 %v462
    %v561 = vunpack.c.l.b16 %v463
    %v562 = vunpack.c.h.b16 %v463
    %v563 = vunpack.c.l.b16 %v464
    %v564 = vunpack.c.h.b16 %v464
    %v565 = vunpack.c.l.b16 %v465
    %v566 = vunpack.c.h.b16 %v465
    %v567 = vunpack.c.l.b16 %v466
    %v568 = vunpack.c.h.b16 %v466
    %v569 = vunpack.c.l.b16 %v467
    %v570 = vunpack.c.h.b16 %v467
    %v571 = vunpack.c.l.b16 %v468
    %v572 = vunpack.c.h.b16 %v468
    %v573 = vunpack.c.l.b16 %v469
    %v574 = vunpack.c.h.b16 %v469
    %v575 = vunpack.c.l.b16 %v470
    %v576 = vunpack.c.h.b16 %v470
    %v577 = vunpack.c.l.b16 %v471
    %v578 = vunpack.c.h.b16 %v471
    %v579 = vunpack.c.l.b16 %v472
    %v580 = vunpack.c.h.b16 %v472
    %v581 = vpack.c.b16 %v519, %v517
    %v582 = vpack.c.b16 %v520, %v518
    %v583 = vpack.c.b16 %v523, %v521
    %v584 = vpack.c.b16 %v524, %v522
    %v585 = vpack.c.b16 %v527, %v525
    %v586 = vpack.c.b16 %v528, %v526
    %v587 = vpack.c.b16 %v531, %v529
    %v588 = vpack.c.b16 %v532, %v530
    %v589 = vpack.c.b16 %v535, %v533
    %v590 = vpack.c.b16 %v536, %v534
    %v591 = vpack.c.b16 %v539, %v537
    %v592 = vpack.c.b16 %v540, %v538
    %v593 = vpack.c.b16 %v543, %v541
    %v594 = vpack.c.b16 %v544, %v542
    %v595 = vpack.c.b16 %v547, %v545
    %v596 = vpack.c.b16 %v548, %v546
    %v597 = vpack.c.b16 %v551, %v549
    %v598 = vpack.c.b16 %v552, %v550
    %v599 = vpack.c.b16 %v555, %v553
    %v600 = vpack.c.b16 %v556, %v554
    %v601 = vpack.c.b16 %v559, %v557
    %v602 = vpack.c.b16 %v560, %v558
    %v603 = vpack.c.b16 %v563, %v561
    %v604 = vpack.c.b16 %v564, %v562
    %v605 = vpack.c.b16 %v567, %v565
    %v606 = vpack.c.b16 %v568, %v566
    %v607 = vpack.c.b16 %v571, %v569
    %v608 = vpack.c.b16 %v572, %v570
    %v609 = vpack.c.b16 %v575, %v573
    %v610 = vpack.c.b16 %v576, %v574
    %v611 = vpack.c.b16 %v579, %v577
    %v612 = vpack.c.b16 %v580, %v578
    %645 = vmatprep.subr.bf16.mxu0 %v582
    %646 = vmatpush1.bf16.msra.mxu0 %v581
    %647 = vmatprep.subr.bf16.mxu0 %v584
    %648 = vmatpush1.bf16.msra.mxu0 %v583
    %649 = vmatprep.subr.bf16.mxu0 %v586
    %650 = vmatpush1.bf16.msra.mxu0 %v585
    %651 = vmatprep.subr.bf16.mxu0 %v588
    %652 = vmatpush1.bf16.msra.mxu0 %v587
    %653 = vmatprep.subr.bf16.mxu0 %v590
    %654 = vmatpush1.bf16.msra.mxu0 %v589
    %655 = vmatprep.subr.bf16.mxu0 %v592
    %656 = vmatpush1.bf16.msra.mxu0 %v591
    %657 = vmatprep.subr.bf16.mxu0 %v594
    %658 = vmatpush1.bf16.msra.mxu0 %v593
    %659 = vmatprep.subr.bf16.mxu0 %v596
    %660 = vmatpush1.bf16.msra.mxu0 %v595
    %661 = vmatprep.subr.bf16.mxu0 %v598
    %662 = vmatpush1.bf16.msra.mxu0 %v597
    %663 = vmatprep.subr.bf16.mxu0 %v600
    %664 = vmatpush1.bf16.msra.mxu0 %v599
    %665 = vmatprep.subr.bf16.mxu0 %v602
    %666 = vmatpush1.bf16.msra.mxu0 %v601
    %667 = vmatprep.subr.bf16.mxu0 %v604
    %668 = vmatpush1.bf16.msra.mxu0 %v603
    %669 = vmatprep.subr.bf16.mxu0 %v606
    %670 = vmatpush1.bf16.msra.mxu0 %v605
    %671 = vmatprep.subr.bf16.mxu0 %v608
    %672 = vmatpush1.bf16.msra.mxu0 %v607
    %673 = vmatprep.subr.bf16.mxu0 %v610
    %674 = vmatpush1.bf16.msra.mxu0 %v609
    %675 = vmatprep.subr.bf16.mxu0 %v612
    %676 = vmatpush1.bf16.msra.mxu0 %v611
    %677 = vmatprep.mubr.bf16.mxu0 %v440
    %678 = vmatmul.mubr.bf16.gmra.mrb[0].mxu0 %v439
    %v679 = vpop.f32.mrb[0].mxu0
    %v680 = vadd.f32 %v478, %v679
    %v681 = vpop.f32.mrb[0].mxu0
    %v682 = vadd.f32 %v482, %v681
    %v683 = vpop.f32.mrb[0].mxu0
    %v684 = vpop.f32.mrb[0].mxu0
    %685 = vdwg.mxu0
    %v686 = vld [vmem:[#allocation12] sm:$0xff]
    %v687 = vld [vmem:[#allocation12 + $0x10] sm:$0xff]
    %v688 = vld [vmem:[#allocation12 + $0x20] sm:$0xff]
    %v689 = vld [vmem:[#allocation12 + $0x30] sm:$0xff]
    %v690 = vld [vmem:[#allocation12 + $0x40] sm:$0xff]
    %v691 = vld [vmem:[#allocation12 + $0x50] sm:$0xff]
    %v692 = vld [vmem:[#allocation12 + $0x60] sm:$0xff]
    %v693 = vld [vmem:[#allocation12 + $0x70] sm:$0xff]
    %v694 = vld [vmem:[#allocation12 + $0x80] sm:$0xff]
    %v695 = vld [vmem:[#allocation12 + $0x90] sm:$0xff]
    %v696 = vld [vmem:[#allocation12 + $0xa0] sm:$0xff]
    %v697 = vld [vmem:[#allocation12 + $0xb0] sm:$0xff]
    %v698 = vld [vmem:[#allocation12 + $0xc0] sm:$0xff]
    %v699 = vld [vmem:[#allocation12 + $0xd0] sm:$0xff]
    %v700 = vld [vmem:[#allocation12 + $0xe0] sm:$0xff]
    %v701 = vld [vmem:[#allocation12 + $0xf0] sm:$0xff]
    %v702 = vld [vmem:[#allocation12 + $0x100] sm:$0xff]
    %v703 = vld [vmem:[#allocation12 + $0x110] sm:$0xff]
    %v704 = vld [vmem:[#allocation12 + $0x120] sm:$0xff]
    %v705 = vld [vmem:[#allocation12 + $0x130] sm:$0xff]
    %v706 = vld [vmem:[#allocation12 + $0x140] sm:$0xff]
    %v707 = vld [vmem:[#allocation12 + $0x150] sm:$0xff]
    %v708 = vld [vmem:[#allocation12 + $0x160] sm:$0xff]
    %v709 = vld [vmem:[#allocation12 + $0x170] sm:$0xff]
    %v710 = vld [vmem:[#allocation12 + $0x180] sm:$0xff]
    %v711 = vld [vmem:[#allocation12 + $0x190] sm:$0xff]
    %v712 = vld [vmem:[#allocation12 + $0x1a0] sm:$0xff]
    %v713 = vld [vmem:[#allocation12 + $0x1b0] sm:$0xff]
    %v714 = vld [vmem:[#allocation12 + $0x1c0] sm:$0xff]
    %v715 = vld [vmem:[#allocation12 + $0x1d0] sm:$0xff]
    %v716 = vld [vmem:[#allocation12 + $0x1e0] sm:$0xff]
    %v717 = vld [vmem:[#allocation12 + $0x1f0] sm:$0xff]
    %v718 = vld [vmem:[%s8] sm:$0x3]
    %v720 = vlaneseq
    %v721 = vshrl.u32 %v720, 7
    %v722 = vsub.s32 0, %v721
    %v723 = vrot.slane %v718, %v722
    %v724 = vlaneseq
    %v725 = vshrl.u32 %v724, 7
    %v726 = vsub.s32 1, %v725
    %v727 = vrot.slane %v718, %v726
    %v762 = vunpack.c.l.b16 %v686
    %v763 = vunpack.c.h.b16 %v686
    %v764 = vunpack.c.l.b16 %v687
    %v765 = vunpack.c.h.b16 %v687
    %v766 = vunpack.c.l.b16 %v688
    %v767 = vunpack.c.h.b16 %v688
    %v768 = vunpack.c.l.b16 %v689
    %v769 = vunpack.c.h.b16 %v689
    %v770 = vunpack.c.l.b16 %v690
    %v771 = vunpack.c.h.b16 %v690
    %v772 = vunpack.c.l.b16 %v691
    %v773 = vunpack.c.h.b16 %v691
    %v774 = vunpack.c.l.b16 %v692
    %v775 = vunpack.c.h.b16 %v692
    %v776 = vunpack.c.l.b16 %v693
    %v777 = vunpack.c.h.b16 %v693
    %v778 = vunpack.c.l.b16 %v694
    %v779 = vunpack.c.h.b16 %v694
    %v780 = vunpack.c.l.b16 %v695
    %v781 = vunpack.c.h.b16 %v695
    %v782 = vunpack.c.l.b16 %v696
    %v783 = vunpack.c.h.b16 %v696
    %v784 = vunpack.c.l.b16 %v697
    %v785 = vunpack.c.h.b16 %v697
    %v786 = vunpack.c.l.b16 %v698
    %v787 = vunpack.c.h.b16 %v698
    %v788 = vunpack.c.l.b16 %v699
    %v789 = vunpack.c.h.b16 %v699
    %v790 = vunpack.c.l.b16 %v700
    %v791 = vunpack.c.h.b16 %v700
    %v792 = vunpack.c.l.b16 %v701
    %v793 = vunpack.c.h.b16 %v701
    %v794 = vunpack.c.l.b16 %v702
    %v795 = vunpack.c.h.b16 %v702
    %v796 = vunpack.c.l.b16 %v703
    %v797 = vunpack.c.h.b16 %v703
    %v798 = vunpack.c.l.b16 %v704
    %v799 = vunpack.c.h.b16 %v704
    %v800 = vunpack.c.l.b16 %v705
    %v801 = vunpack.c.h.b16 %v705
    %v802 = vunpack.c.l.b16 %v706
    %v803 = vunpack.c.h.b16 %v706
    %v804 = vunpack.c.l.b16 %v707
    %v805 = vunpack.c.h.b16 %v707
    %v806 = vunpack.c.l.b16 %v708
    %v807 = vunpack.c.h.b16 %v708
    %v808 = vunpack.c.l.b16 %v709
    %v809 = vunpack.c.h.b16 %v709
    %v810 = vunpack.c.l.b16 %v710
    %v811 = vunpack.c.h.b16 %v710
    %v812 = vunpack.c.l.b16 %v711
    %v813 = vunpack.c.h.b16 %v711
    %v814 = vunpack.c.l.b16 %v712
    %v815 = vunpack.c.h.b16 %v712
    %v816 = vunpack.c.l.b16 %v713
    %v817 = vunpack.c.h.b16 %v713
    %v818 = vunpack.c.l.b16 %v714
    %v819 = vunpack.c.h.b16 %v714
    %v820 = vunpack.c.l.b16 %v715
    %v821 = vunpack.c.h.b16 %v715
    %v822 = vunpack.c.l.b16 %v716
    %v823 = vunpack.c.h.b16 %v716
    %v824 = vunpack.c.l.b16 %v717
    %v825 = vunpack.c.h.b16 %v717
    %v826 = vpack.c.b16 %v764, %v762
    %v827 = vpack.c.b16 %v765, %v763
    %v828 = vpack.c.b16 %v768, %v766
    %v829 = vpack.c.b16 %v769, %v767
    %v830 = vpack.c.b16 %v772, %v770
    %v831 = vpack.c.b16 %v773, %v771
    %v832 = vpack.c.b16 %v776, %v774
    %v833 = vpack.c.b16 %v777, %v775
    %v834 = vpack.c.b16 %v780, %v778
    %v835 = vpack.c.b16 %v781, %v779
    %v836 = vpack.c.b16 %v784, %v782
    %v837 = vpack.c.b16 %v785, %v783
    %v838 = vpack.c.b16 %v788, %v786
    %v839 = vpack.c.b16 %v789, %v787
    %v840 = vpack.c.b16 %v792, %v790
    %v841 = vpack.c.b16 %v793, %v791
    %v842 = vpack.c.b16 %v796, %v794
    %v843 = vpack.c.b16 %v797, %v795
    %v844 = vpack.c.b16 %v800, %v798
    %v845 = vpack.c.b16 %v801, %v799
    %v846 = vpack.c.b16 %v804, %v802
    %v847 = vpack.c.b16 %v805, %v803
    %v848 = vpack.c.b16 %v808, %v806
    %v849 = vpack.c.b16 %v809, %v807
    %v850 = vpack.c.b16 %v812, %v810
    %v851 = vpack.c.b16 %v813, %v811
    %v852 = vpack.c.b16 %v816, %v814
    %v853 = vpack.c.b16 %v817, %v815
    %v854 = vpack.c.b16 %v820, %v818
    %v855 = vpack.c.b16 %v821, %v819
    %v856 = vpack.c.b16 %v824, %v822
    %v857 = vpack.c.b16 %v825, %v823
    %890 = vmatprep.subr.bf16.mxu0 %v827
    %891 = vmatpush1.bf16.msra.mxu0 %v826
    %892 = vmatprep.subr.bf16.mxu0 %v829
    %893 = vmatpush1.bf16.msra.mxu0 %v828
    %894 = vmatprep.subr.bf16.mxu0 %v831
    %895 = vmatpush1.bf16.msra.mxu0 %v830
    %896 = vmatprep.subr.bf16.mxu0 %v833
    %897 = vmatpush1.bf16.msra.mxu0 %v832
    %898 = vmatprep.subr.bf16.mxu0 %v835
    %899 = vmatpush1.bf16.msra.mxu0 %v834
    %900 = vmatprep.subr.bf16.mxu0 %v837
    %901 = vmatpush1.bf16.msra.mxu0 %v836
    %902 = vmatprep.subr.bf16.mxu0 %v839
    %903 = vmatpush1.bf16.msra.mxu0 %v838
    %904 = vmatprep.subr.bf16.mxu0 %v841
    %905 = vmatpush1.bf16.msra.mxu0 %v840
    %906 = vmatprep.subr.bf16.mxu0 %v843
    %907 = vmatpush1.bf16.msra.mxu0 %v842
    %908 = vmatprep.subr.bf16.mxu0 %v845
    %909 = vmatpush1.bf16.msra.mxu0 %v844
    %910 = vmatprep.subr.bf16.mxu0 %v847
    %911 = vmatpush1.bf16.msra.mxu0 %v846
    %912 = vmatprep.subr.bf16.mxu0 %v849
    %913 = vmatpush1.bf16.msra.mxu0 %v848
    %914 = vmatprep.subr.bf16.mxu0 %v851
    %915 = vmatpush1.bf16.msra.mxu0 %v850
    %916 = vmatprep.subr.bf16.mxu0 %v853
    %917 = vmatpush1.bf16.msra.mxu0 %v852
    %918 = vmatprep.subr.bf16.mxu0 %v855
    %919 = vmatpush1.bf16.msra.mxu0 %v854
    %920 = vmatprep.subr.bf16.mxu0 %v857
    %921 = vmatpush1.bf16.msra.mxu0 %v856
    %922 = vmatprep.mubr.bf16.mxu0 %v440
    %923 = vmatmul.mubr.bf16.gmra.mrb[0].mxu0 %v439
    %v924 = vpop.f32.mrb[0].mxu0
    %v925 = vadd.f32 %v723, %v924
    %v926 = vpop.f32.mrb[0].mxu0
    %v927 = vadd.f32 %v727, %v926
    %v928 = vpop.f32.mrb[0].mxu0
    %v929 = vpop.f32.mrb[0].mxu0
    %930 = vdwg.mxu0
    %v931 = vmax.f32 %v680, %v925
    %v932 = vmax.f32 %v682, %v927
    %v933 = vpack.c.bf16 %v931, %v931
    %v934 = vpack.c.bf16 %v932, %v932
    %vm935 = vcmp.ge.bf16.partialorder %v933, 0
    %vm936 = vcmp.ge.bf16.partialorder %v934, 0
    %v937 = vmul.bf16 %v933, 1048592000
    %v938 = vmul.bf16 %v934, 1048592000
    %v939 = vsel %vm935, %v933, %v937
    %v940 = vsel %vm936, %v934, %v938
    %v941 = vld [vmem:[#allocation13] sm:$0xff]
    %v942 = vld [vmem:[#allocation13 + $0x8] sm:$0xff]
    %v943 = vld [vmem:[#allocation13 + $0x10] sm:$0xff]
    %v944 = vld [vmem:[#allocation13 + $0x18] sm:$0xff]
    %v945 = vld [vmem:[#allocation13 + $0x20] sm:$0xff]
    %v946 = vld [vmem:[#allocation13 + $0x28] sm:$0xff]
    %v947 = vld [vmem:[#allocation13 + $0x30] sm:$0xff]
    %v948 = vld [vmem:[#allocation13 + $0x38] sm:$0xff]
    %v949 = vld [vmem:[#allocation13 + $0x40] sm:$0xff]
    %v950 = vld [vmem:[#allocation13 + $0x48] sm:$0xff]
    %v951 = vld [vmem:[#allocation13 + $0x50] sm:$0xff]
    %v952 = vld [vmem:[#allocation13 + $0x58] sm:$0xff]
    %v953 = vld [vmem:[#allocation13 + $0x60] sm:$0xff]
    %v954 = vld [vmem:[#allocation13 + $0x68] sm:$0xff]
    %v955 = vld [vmem:[#allocation13 + $0x70] sm:$0xff]
    %v956 = vld [vmem:[#allocation13 + $0x78] sm:$0xff]
    %v957 = vld [vmem:[#allocation13 + $0x80] sm:$0xff]
    %v958 = vld [vmem:[#allocation13 + $0x88] sm:$0xff]
    %v959 = vld [vmem:[#allocation13 + $0x90] sm:$0xff]
    %v960 = vld [vmem:[#allocation13 + $0x98] sm:$0xff]
    %v961 = vld [vmem:[#allocation13 + $0xa0] sm:$0xff]
    %v962 = vld [vmem:[#allocation13 + $0xa8] sm:$0xff]
    %v963 = vld [vmem:[#allocation13 + $0xb0] sm:$0xff]
    %v964 = vld [vmem:[#allocation13 + $0xb8] sm:$0xff]
    %v965 = vld [vmem:[#allocation13 + $0xc0] sm:$0xff]
    %v966 = vld [vmem:[#allocation13 + $0xc8] sm:$0xff]
    %v967 = vld [vmem:[#allocation13 + $0xd0] sm:$0xff]
    %v968 = vld [vmem:[#allocation13 + $0xd8] sm:$0xff]
    %v969 = vld [vmem:[#allocation13 + $0xe0] sm:$0xff]
    %v970 = vld [vmem:[#allocation13 + $0xe8] sm:$0xff]
    %v971 = vld [vmem:[#allocation13 + $0xf0] sm:$0xff]
    %v972 = vld [vmem:[#allocation13 + $0xf8] sm:$0xff]
    %v973 = vld [vmem:[#allocation10 + $0x8] sm:$0xff]
    %v974 = vld [vmem:[#allocation10 + $0x18] sm:$0xff]
    %v975 = vld [vmem:[#allocation10 + $0x28] sm:$0xff]
    %v976 = vld [vmem:[#allocation10 + $0x38] sm:$0xff]
    %v977 = vld [vmem:[#allocation10 + $0x48] sm:$0xff]
    %v978 = vld [vmem:[#allocation10 + $0x58] sm:$0xff]
    %v979 = vld [vmem:[#allocation10 + $0x68] sm:$0xff]
    %v980 = vld [vmem:[#allocation10 + $0x78] sm:$0xff]
    %v981 = vld [vmem:[#allocation10 + $0x88] sm:$0xff]
    %v982 = vld [vmem:[#allocation10 + $0x98] sm:$0xff]
    %v983 = vld [vmem:[#allocation10 + $0xa8] sm:$0xff]
    %v984 = vld [vmem:[#allocation10 + $0xb8] sm:$0xff]
    %v985 = vld [vmem:[#allocation10 + $0xc8] sm:$0xff]
    %v986 = vld [vmem:[#allocation10 + $0xd8] sm:$0xff]
    %v987 = vld [vmem:[#allocation10 + $0xe8] sm:$0xff]
    %v988 = vld [vmem:[#allocation10 + $0xf8] sm:$0xff]
    %v989 = vld [vmem:[#allocation10 + $0x108] sm:$0xff]
    %v990 = vld [vmem:[#allocation10 + $0x118] sm:$0xff]
    %v991 = vld [vmem:[#allocation10 + $0x128] sm:$0xff]
    %v992 = vld [vmem:[#allocation10 + $0x138] sm:$0xff]
    %v993 = vld [vmem:[#allocation10 + $0x148] sm:$0xff]
    %v994 = vld [vmem:[#allocation10 + $0x158] sm:$0xff]
    %v995 = vld [vmem:[#allocation10 + $0x168] sm:$0xff]
    %v996 = vld [vmem:[#allocation10 + $0x178] sm:$0xff]
    %v997 = vld [vmem:[#allocation10 + $0x188] sm:$0xff]
    %v998 = vld [vmem:[#allocation10 + $0x198] sm:$0xff]
    %v999 = vld [vmem:[#allocation10 + $0x1a8] sm:$0xff]
    %v1000 = vld [vmem:[#allocation10 + $0x1b8] sm:$0xff]
    %v1001 = vld [vmem:[#allocation10 + $0x1c8] sm:$0xff]
    %v1002 = vld [vmem:[#allocation10 + $0x1d8] sm:$0xff]
    %v1003 = vld [vmem:[#allocation10 + $0x1e8] sm:$0xff]
    %v1004 = vld [vmem:[#allocation10 + $0x1f8] sm:$0xff]
    %v1005 = vld [vmem:[%s6 + $0x2] sm:$0x3]
    %v1007 = vlaneseq
    %v1008 = vshrl.u32 %v1007, 7
    %v1009 = vsub.s32 0, %v1008
    %v1010 = vrot.slane %v1005, %v1009
    %v1011 = vlaneseq
    %v1012 = vshrl.u32 %v1011, 7
    %v1013 = vsub.s32 1, %v1012
    %v1014 = vrot.slane %v1005, %v1013
    %v1049 = vunpack.c.l.b16 %v973
    %v1050 = vunpack.c.h.b16 %v973
    %v1051 = vunpack.c.l.b16 %v974
    %v1052 = vunpack.c.h.b16 %v974
    %v1053 = vunpack.c.l.b16 %v975
    %v1054 = vunpack.c.h.b16 %v975
    %v1055 = vunpack.c.l.b16 %v976
    %v1056 = vunpack.c.h.b16 %v976
    %v1057 = vunpack.c.l.b16 %v977
    %v1058 = vunpack.c.h.b16 %v977
    %v1059 = vunpack.c.l.b16 %v978
    %v1060 = vunpack.c.h.b16 %v978
    %v1061 = vunpack.c.l.b16 %v979
    %v1062 = vunpack.c.h.b16 %v979
    %v1063 = vunpack.c.l.b16 %v980
    %v1064 = vunpack.c.h.b16 %v980
    %v1065 = vunpack.c.l.b16 %v981
    %v1066 = vunpack.c.h.b16 %v981
    %v1067 = vunpack.c.l.b16 %v982
    %v1068 = vunpack.c.h.b16 %v982
    %v1069 = vunpack.c.l.b16 %v983
    %v1070 = vunpack.c.h.b16 %v983
    %v1071 = vunpack.c.l.b16 %v984
    %v1072 = vunpack.c.h.b16 %v984
    %v1073 = vunpack.c.l.b16 %v985
    %v1074 = vunpack.c.h.b16 %v985
    %v1075 = vunpack.c.l.b16 %v986
    %v1076 = vunpack.c.h.b16 %v986
    %v1077 = vunpack.c.l.b16 %v987
    %v1078 = vunpack.c.h.b16 %v987
    %v1079 = vunpack.c.l.b16 %v988
    %v1080 = vunpack.c.h.b16 %v988
    %v1081 = vunpack.c.l.b16 %v989
    %v1082 = vunpack.c.h.b16 %v989
    %v1083 = vunpack.c.l.b16 %v990
    %v1084 = vunpack.c.h.b16 %v990
    %v1085 = vunpack.c.l.b16 %v991
    %v1086 = vunpack.c.h.b16 %v991
    %v1087 = vunpack.c.l.b16 %v992
    %v1088 = vunpack.c.h.b16 %v992
    %v1089 = vunpack.c.l.b16 %v993
    %v1090 = vunpack.c.h.b16 %v993
    %v1091 = vunpack.c.l.b16 %v994
    %v1092 = vunpack.c.h.b16 %v994
    %v1093 = vunpack.c.l.b16 %v995
    %v1094 = vunpack.c.h.b16 %v995
    %v1095 = vunpack.c.l.b16 %v996
    %v1096 = vunpack.c.h.b16 %v996
    %v1097 = vunpack.c.l.b16 %v997
    %v1098 = vunpack.c.h.b16 %v997
    %v1099 = vunpack.c.l.b16 %v998
    %v1100 = vunpack.c.h.b16 %v998
    %v1101 = vunpack.c.l.b16 %v999
    %v1102 = vunpack.c.h.b16 %v999
    %v1103 = vunpack.c.l.b16 %v1000
    %v1104 = vunpack.c.h.b16 %v1000
    %v1105 = vunpack.c.l.b16 %v1001
    %v1106 = vunpack.c.h.b16 %v1001
    %v1107 = vunpack.c.l.b16 %v1002
    %v1108 = vunpack.c.h.b16 %v1002
    %v1109 = vunpack.c.l.b16 %v1003
    %v1110 = vunpack.c.h.b16 %v1003
    %v1111 = vunpack.c.l.b16 %v1004
    %v1112 = vunpack.c.h.b16 %v1004
    %v1113 = vpack.c.b16 %v1051, %v1049
    %v1114 = vpack.c.b16 %v1052, %v1050
    %v1115 = vpack.c.b16 %v1055, %v1053
    %v1116 = vpack.c.b16 %v1056, %v1054
    %v1117 = vpack.c.b16 %v1059, %v1057
    %v1118 = vpack.c.b16 %v1060, %v1058
    %v1119 = vpack.c.b16 %v1063, %v1061
    %v1120 = vpack.c.b16 %v1064, %v1062
    %v1121 = vpack.c.b16 %v1067, %v1065
    %v1122 = vpack.c.b16 %v1068, %v1066
    %v1123 = vpack.c.b16 %v1071, %v1069
    %v1124 = vpack.c.b16 %v1072, %v1070
    %v1125 = vpack.c.b16 %v1075, %v1073
    %v1126 = vpack.c.b16 %v1076, %v1074
    %v1127 = vpack.c.b16 %v1079, %v1077
    %v1128 = vpack.c.b16 %v1080, %v1078
    %v1129 = vpack.c.b16 %v1083, %v1081
    %v1130 = vpack.c.b16 %v1084, %v1082
    %v1131 = vpack.c.b16 %v1087, %v1085
    %v1132 = vpack.c.b16 %v1088, %v1086
    %v1133 = vpack.c.b16 %v1091, %v1089
    %v1134 = vpack.c.b16 %v1092, %v1090
    %v1135 = vpack.c.b16 %v1095, %v1093
    %v1136 = vpack.c.b16 %v1096, %v1094
    %v1137 = vpack.c.b16 %v1099, %v1097
    %v1138 = vpack.c.b16 %v1100, %v1098
    %v1139 = vpack.c.b16 %v1103, %v1101
    %v1140 = vpack.c.b16 %v1104, %v1102
    %v1141 = vpack.c.b16 %v1107, %v1105
    %v1142 = vpack.c.b16 %v1108, %v1106
    %v1143 = vpack.c.b16 %v1111, %v1109
    %v1144 = vpack.c.b16 %v1112, %v1110
    %1177 = vmatprep.subr.bf16.mxu0 %v1114
    %1178 = vmatpush1.bf16.msra.mxu0 %v1113
    %1179 = vmatprep.subr.bf16.mxu0 %v1116
    %1180 = vmatpush1.bf16.msra.mxu0 %v1115
    %1181 = vmatprep.subr.bf16.mxu0 %v1118
    %1182 = vmatpush1.bf16.msra.mxu0 %v1117
    %1183 = vmatprep.subr.bf16.mxu0 %v1120
    %1184 = vmatpush1.bf16.msra.mxu0 %v1119
    %1185 = vmatprep.subr.bf16.mxu0 %v1122
    %1186 = vmatpush1.bf16.msra.mxu0 %v1121
    %1187 = vmatprep.subr.bf16.mxu0 %v1124
    %1188 = vmatpush1.bf16.msra.mxu0 %v1123
    %1189 = vmatprep.subr.bf16.mxu0 %v1126
    %1190 = vmatpush1.bf16.msra.mxu0 %v1125
    %1191 = vmatprep.subr.bf16.mxu0 %v1128
    %1192 = vmatpush1.bf16.msra.mxu0 %v1127
    %1193 = vmatprep.subr.bf16.mxu0 %v1130
    %1194 = vmatpush1.bf16.msra.mxu0 %v1129
    %1195 = vmatprep.subr.bf16.mxu0 %v1132
    %1196 = vmatpush1.bf16.msra.mxu0 %v1131
    %1197 = vmatprep.subr.bf16.mxu0 %v1134
    %1198 = vmatpush1.bf16.msra.mxu0 %v1133
    %1199 = vmatprep.subr.bf16.mxu0 %v1136
    %1200 = vmatpush1.bf16.msra.mxu0 %v1135
    %1201 = vmatprep.subr.bf16.mxu0 %v1138
    %1202 = vmatpush1.bf16.msra.mxu0 %v1137
    %1203 = vmatprep.subr.bf16.mxu0 %v1140
    %1204 = vmatpush1.bf16.msra.mxu0 %v1139
    %1205 = vmatprep.subr.bf16.mxu0 %v1142
    %1206 = vmatpush1.bf16.msra.mxu0 %v1141
    %1207 = vmatprep.subr.bf16.mxu0 %v1144
    %1208 = vmatpush1.bf16.msra.mxu0 %v1143
    %1209 = vmatprep.mubr.bf16.mxu0 %v440
    %1210 = vmatmul.mubr.bf16.gmra.mrb[0].mxu0 %v439
    %v1211 = vpop.f32.mrb[0].mxu0
    %v1212 = vadd.f32 %v1010, %v1211
    %v1213 = vpop.f32.mrb[0].mxu0
    %v1214 = vadd.f32 %v1014, %v1213
    %v1215 = vpop.f32.mrb[0].mxu0
    %v1216 = vpop.f32.mrb[0].mxu0
    %1217 = vdwg.mxu0
    %v1218 = vld [vmem:[#allocation12 + $0x8] sm:$0xff]
    %v1219 = vld [vmem:[#allocation12 + $0x18] sm:$0xff]
    %v1220 = vld [vmem:[#allocation12 + $0x28] sm:$0xff]
    %v1221 = vld [vmem:[#allocation12 + $0x38] sm:$0xff]
    %v1222 = vld [vmem:[#allocation12 + $0x48] sm:$0xff]
    %v1223 = vld [vmem:[#allocation12 + $0x58] sm:$0xff]
    %v1224 = vld [vmem:[#allocation12 + $0x68] sm:$0xff]
    %v1225 = vld [vmem:[#allocation12 + $0x78] sm:$0xff]
    %v1226 = vld [vmem:[#allocation12 + $0x88] sm:$0xff]
    %v1227 = vld [vmem:[#allocation12 + $0x98] sm:$0xff]
    %v1228 = vld [vmem:[#allocation12 + $0xa8] sm:$0xff]
    %v1229 = vld [vmem:[#allocation12 + $0xb8] sm:$0xff]
    %v1230 = vld [vmem:[#allocation12 + $0xc8] sm:$0xff]
    %v1231 = vld [vmem:[#allocation12 + $0xd8] sm:$0xff]
    %v1232 = vld [vmem:[#allocation12 + $0xe8] sm:$0xff]
    %v1233 = vld [vmem:[#allocation12 + $0xf8] sm:$0xff]
    %v1234 = vld [vmem:[#allocation12 + $0x108] sm:$0xff]
    %v1235 = vld [vmem:[#allocation12 + $0x118] sm:$0xff]
    %v1236 = vld [vmem:[#allocation12 + $0x128] sm:$0xff]
    %v1237 = vld [vmem:[#allocation12 + $0x138] sm:$0xff]
    %v1238 = vld [vmem:[#allocation12 + $0x148] sm:$0xff]
    %v1239 = vld [vmem:[#allocation12 + $0x158] sm:$0xff]
    %v1240 = vld [vmem:[#allocation12 + $0x168] sm:$0xff]
    %v1241 = vld [vmem:[#allocation12 + $0x178] sm:$0xff]
    %v1242 = vld [vmem:[#allocation12 + $0x188] sm:$0xff]
    %v1243 = vld [vmem:[#allocation12 + $0x198] sm:$0xff]
    %v1244 = vld [vmem:[#allocation12 + $0x1a8] sm:$0xff]
    %v1245 = vld [vmem:[#allocation12 + $0x1b8] sm:$0xff]
    %v1246 = vld [vmem:[#allocation12 + $0x1c8] sm:$0xff]
    %v1247 = vld [vmem:[#allocation12 + $0x1d8] sm:$0xff]
    %v1248 = vld [vmem:[#allocation12 + $0x1e8] sm:$0xff]
    %v1249 = vld [vmem:[#allocation12 + $0x1f8] sm:$0xff]
    %v1250 = vld [vmem:[%s8 + $0x2] sm:$0x3]
    %v1252 = vlaneseq
    %v1253 = vshrl.u32 %v1252, 7
    %v1254 = vsub.s32 0, %v1253
    %v1255 = vrot.slane %v1250, %v1254
    %v1256 = vlaneseq
    %v1257 = vshrl.u32 %v1256, 7
    %v1258 = vsub.s32 1, %v1257
    %v1259 = vrot.slane %v1250, %v1258
    %v1294 = vunpack.c.l.b16 %v1218
    %v1295 = vunpack.c.h.b16 %v1218
    %v1296 = vunpack.c.l.b16 %v1219
    %v1297 = vunpack.c.h.b16 %v1219
    %v1298 = vunpack.c.l.b16 %v1220
    %v1299 = vunpack.c.h.b16 %v1220
    %v1300 = vunpack.c.l.b16 %v1221
    %v1301 = vunpack.c.h.b16 %v1221
    %v1302 = vunpack.c.l.b16 %v1222
    %v1303 = vunpack.c.h.b16 %v1222
    %v1304 = vunpack.c.l.b16 %v1223
    %v1305 = vunpack.c.h.b16 %v1223
    %v1306 = vunpack.c.l.b16 %v1224
    %v1307 = vunpack.c.h.b16 %v1224
    %v1308 = vunpack.c.l.b16 %v1225
    %v1309 = vunpack.c.h.b16 %v1225
    %v1310 = vunpack.c.l.b16 %v1226
    %v1311 = vunpack.c.h.b16 %v1226
    %v1312 = vunpack.c.l.b16 %v1227
    %v1313 = vunpack.c.h.b16 %v1227
    %v1314 = vunpack.c.l.b16 %v1228
    %v1315 = vunpack.c.h.b16 %v1228
    %v1316 = vunpack.c.l.b16 %v1229
    %v1317 = vunpack.c.h.b16 %v1229
    %v1318 = vunpack.c.l.b16 %v1230
    %v1319 = vunpack.c.h.b16 %v1230
    %v1320 = vunpack.c.l.b16 %v1231
    %v1321 = vunpack.c.h.b16 %v1231
    %v1322 = vunpack.c.l.b16 %v1232
    %v1323 = vunpack.c.h.b16 %v1232
    %v1324 = vunpack.c.l.b16 %v1233
    %v1325 = vunpack.c.h.b16 %v1233
    %v1326 = vunpack.c.l.b16 %v1234
    %v1327 = vunpack.c.h.b16 %v1234
    %v1328 = vunpack.c.l.b16 %v1235
    %v1329 = vunpack.c.h.b16 %v1235
    %v1330 = vunpack.c.l.b16 %v1236
    %v1331 = vunpack.c.h.b16 %v1236
    %v1332 = vunpack.c.l.b16 %v1237
    %v1333 = vunpack.c.h.b16 %v1237
    %v1334 = vunpack.c.l.b16 %v1238
    %v1335 = vunpack.c.h.b16 %v1238
    %v1336 = vunpack.c.l.b16 %v1239
    %v1337 = vunpack.c.h.b16 %v1239
    %v1338 = vunpack.c.l.b16 %v1240
    %v1339 = vunpack.c.h.b16 %v1240
    %v1340 = vunpack.c.l.b16 %v1241
    %v1341 = vunpack.c.h.b16 %v1241
    %v1342 = vunpack.c.l.b16 %v1242
    %v1343 = vunpack.c.h.b16 %v1242
    %v1344 = vunpack.c.l.b16 %v1243
    %v1345 = vunpack.c.h.b16 %v1243
    %v1346 = vunpack.c.l.b16 %v1244
    %v1347 = vunpack.c.h.b16 %v1244
    %v1348 = vunpack.c.l.b16 %v1245
    %v1349 = vunpack.c.h.b16 %v1245
    %v1350 = vunpack.c.l.b16 %v1246
    %v1351 = vunpack.c.h.b16 %v1246
    %v1352 = vunpack.c.l.b16 %v1247
    %v1353 = vunpack.c.h.b16 %v1247
    %v1354 = vunpack.c.l.b16 %v1248
    %v1355 = vunpack.c.h.b16 %v1248
    %v1356 = vunpack.c.l.b16 %v1249
    %v1357 = vunpack.c.h.b16 %v1249
    %v1358 = vpack.c.b16 %v1296, %v1294
    %v1359 = vpack.c.b16 %v1297, %v1295
    %v1360 = vpack.c.b16 %v1300, %v1298
    %v1361 = vpack.c.b16 %v1301, %v1299
    %v1362 = vpack.c.b16 %v1304, %v1302
    %v1363 = vpack.c.b16 %v1305, %v1303
    %v1364 = vpack.c.b16 %v1308, %v1306
    %v1365 = vpack.c.b16 %v1309, %v1307
    %v1366 = vpack.c.b16 %v1312, %v1310
    %v1367 = vpack.c.b16 %v1313, %v1311
    %v1368 = vpack.c.b16 %v1316, %v1314
    %v1369 = vpack.c.b16 %v1317, %v1315
    %v1370 = vpack.c.b16 %v1320, %v1318
    %v1371 = vpack.c.b16 %v1321, %v1319
    %v1372 = vpack.c.b16 %v1324, %v1322
    %v1373 = vpack.c.b16 %v1325, %v1323
    %v1374 = vpack.c.b16 %v1328, %v1326
    %v1375 = vpack.c.b16 %v1329, %v1327
    %v1376 = vpack.c.b16 %v1332, %v1330
    %v1377 = vpack.c.b16 %v1333, %v1331
    %v1378 = vpack.c.b16 %v1336, %v1334
    %v1379 = vpack.c.b16 %v1337, %v1335
    %v1380 = vpack.c.b16 %v1340, %v1338
    %v1381 = vpack.c.b16 %v1341, %v1339
    %v1382 = vpack.c.b16 %v1344, %v1342
    %v1383 = vpack.c.b16 %v1345, %v1343
    %v1384 = vpack.c.b16 %v1348, %v1346
    %v1385 = vpack.c.b16 %v1349, %v1347
    %v1386 = vpack.c.b16 %v1352, %v1350
    %v1387 = vpack.c.b16 %v1353, %v1351
    %v1388 = vpack.c.b16 %v1356, %v1354
    %v1389 = vpack.c.b16 %v1357, %v1355
    %1422 = vmatprep.subr.bf16.mxu0 %v1359
    %1423 = vmatpush1.bf16.msra.mxu0 %v1358
    %1424 = vmatprep.subr.bf16.mxu0 %v1361
    %1425 = vmatpush1.bf16.msra.mxu0 %v1360
    %1426 = vmatprep.subr.bf16.mxu0 %v1363
    %1427 = vmatpush1.bf16.msra.mxu0 %v1362
    %1428 = vmatprep.subr.bf16.mxu0 %v1365
    %1429 = vmatpush1.bf16.msra.mxu0 %v1364
    %1430 = vmatprep.subr.bf16.mxu0 %v1367
    %1431 = vmatpush1.bf16.msra.mxu0 %v1366
    %1432 = vmatprep.subr.bf16.mxu0 %v1369
    %1433 = vmatpush1.bf16.msra.mxu0 %v1368
    %1434 = vmatprep.subr.bf16.mxu0 %v1371
    %1435 = vmatpush1.bf16.msra.mxu0 %v1370
    %1436 = vmatprep.subr.bf16.mxu0 %v1373
    %1437 = vmatpush1.bf16.msra.mxu0 %v1372
    %1438 = vmatprep.subr.bf16.mxu0 %v1375
    %1439 = vmatpush1.bf16.msra.mxu0 %v1374
    %1440 = vmatprep.subr.bf16.mxu0 %v1377
    %1441 = vmatpush1.bf16.msra.mxu0 %v1376
    %1442 = vmatprep.subr.bf16.mxu0 %v1379
    %1443 = vmatpush1.bf16.msra.mxu0 %v1378
    %1444 = vmatprep.subr.bf16.mxu0 %v1381
    %1445 = vmatpush1.bf16.msra.mxu0 %v1380
    %1446 = vmatprep.subr.bf16.mxu0 %v1383
    %1447 = vmatpush1.bf16.msra.mxu0 %v1382
    %1448 = vmatprep.subr.bf16.mxu0 %v1385
    %1449 = vmatpush1.bf16.msra.mxu0 %v1384
    %1450 = vmatprep.subr.bf16.mxu0 %v1387
    %1451 = vmatpush1.bf16.msra.mxu0 %v1386
    %1452 = vmatprep.subr.bf16.mxu0 %v1389
    %1453 = vmatpush1.bf16.msra.mxu0 %v1388
    %1454 = vmatprep.mubr.bf16.mxu0 %v440
    %1455 = vmatmul.mubr.bf16.gmra.mrb[0].mxu0 %v439
    %v1456 = vpop.f32.mrb[0].mxu0
    %v1457 = vadd.f32 %v1255, %v1456
    %v1458 = vpop.f32.mrb[0].mxu0
    %v1459 = vadd.f32 %v1259, %v1458
    %v1460 = vpop.f32.mrb[0].mxu0
    %v1461 = vpop.f32.mrb[0].mxu0
    %1462 = vdwg.mxu0
    %v1463 = vmax.f32 %v1212, %v1457
    %v1464 = vmax.f32 %v1214, %v1459
    %v1465 = vpack.c.bf16 %v1463, %v1463
    %v1466 = vpack.c.bf16 %v1464, %v1464
    %vm1467 = vcmp.ge.bf16.partialorder %v1465, 0
    %vm1468 = vcmp.ge.bf16.partialorder %v1466, 0
    %v1469 = vmul.bf16 %v1465, 1048592000
    %v1470 = vmul.bf16 %v1466, 1048592000
    %v1471 = vsel %vm1467, %v1465, %v1469
    %v1472 = vsel %vm1468, %v1466, %v1470
    %v1473 = vld [vmem:[#allocation13 + $0x100] sm:$0xff]
    %v1474 = vld [vmem:[#allocation13 + $0x108] sm:$0xff]
    %v1475 = vld [vmem:[#allocation13 + $0x110] sm:$0xff]
    %v1476 = vld [vmem:[#allocation13 + $0x118] sm:$0xff]
    %v1477 = vld [vmem:[#allocation13 + $0x120] sm:$0xff]
    %v1478 = vld [vmem:[#allocation13 + $0x128] sm:$0xff]
    %v1479 = vld [vmem:[#allocation13 + $0x130] sm:$0xff]
    %v1480 = vld [vmem:[#allocation13 + $0x138] sm:$0xff]
    %v1481 = vld [vmem:[#allocation13 + $0x140] sm:$0xff]
    %v1482 = vld [vmem:[#allocation13 + $0x148] sm:$0xff]
    %v1483 = vld [vmem:[#allocation13 + $0x150] sm:$0xff]
    %v1484 = vld [vmem:[#allocation13 + $0x158] sm:$0xff]
    %v1485 = vld [vmem:[#allocation13 + $0x160] sm:$0xff]
    %v1486 = vld [vmem:[#allocation13 + $0x168] sm:$0xff]
    %v1487 = vld [vmem:[#allocation13 + $0x170] sm:$0xff]
    %v1488 = vld [vmem:[#allocation13 + $0x178] sm:$0xff]
    %v1489 = vld [vmem:[#allocation13 + $0x180] sm:$0xff]
    %v1490 = vld [vmem:[#allocation13 + $0x188] sm:$0xff]
    %v1491 = vld [vmem:[#allocation13 + $0x190] sm:$0xff]
    %v1492 = vld [vmem:[#allocation13 + $0x198] sm:$0xff]
    %v1493 = vld [vmem:[#allocation13 + $0x1a0] sm:$0xff]
    %v1494 = vld [vmem:[#allocation13 + $0x1a8] sm:$0xff]
    %v1495 = vld [vmem:[#allocation13 + $0x1b0] sm:$0xff]
    %v1496 = vld [vmem:[#allocation13 + $0x1b8] sm:$0xff]
    %v1497 = vld [vmem:[#allocation13 + $0x1c0] sm:$0xff]
    %v1498 = vld [vmem:[#allocation13 + $0x1c8] sm:$0xff]
    %v1499 = vld [vmem:[#allocation13 + $0x1d0] sm:$0xff]
    %v1500 = vld [vmem:[#allocation13 + $0x1d8] sm:$0xff]
    %v1501 = vld [vmem:[#allocation13 + $0x1e0] sm:$0xff]
    %v1502 = vld [vmem:[#allocation13 + $0x1e8] sm:$0xff]
    %v1503 = vld [vmem:[#allocation13 + $0x1f0] sm:$0xff]
    %v1504 = vld [vmem:[#allocation13 + $0x1f8] sm:$0xff]
    %v1537 = vunpack.c.l.b16 %v1473
    %v1538 = vunpack.c.h.b16 %v1473
    %v1539 = vunpack.c.l.b16 %v1474
    %v1540 = vunpack.c.h.b16 %v1474
    %v1541 = vunpack.c.l.b16 %v1475
    %v1542 = vunpack.c.h.b16 %v1475
    %v1543 = vunpack.c.l.b16 %v1476
    %v1544 = vunpack.c.h.b16 %v1476
    %v1545 = vunpack.c.l.b16 %v1477
    %v1546 = vunpack.c.h.b16 %v1477
    %v1547 = vunpack.c.l.b16 %v1478
    %v1548 = vunpack.c.h.b16 %v1478
    %v1549 = vunpack.c.l.b16 %v1479
    %v1550 = vunpack.c.h.b16 %v1479
    %v1551 = vunpack.c.l.b16 %v1480
    %v1552 = vunpack.c.h.b16 %v1480
    %v1553 = vunpack.c.l.b16 %v1481
    %v1554 = vunpack.c.h.b16 %v1481
    %v1555 = vunpack.c.l.b16 %v1482
    %v1556 = vunpack.c.h.b16 %v1482
    %v1557 = vunpack.c.l.b16 %v1483
    %v1558 = vunpack.c.h.b16 %v1483
    %v1559 = vunpack.c.l.b16 %v1484
    %v1560 = vunpack.c.h.b16 %v1484
    %v1561 = vunpack.c.l.b16 %v1485
    %v1562 = vunpack.c.h.b16 %v1485
    %v1563 = vunpack.c.l.b16 %v1486
    %v1564 = vunpack.c.h.b16 %v1486
    %v1565 = vunpack.c.l.b16 %v1487
    %v1566 = vunpack.c.h.b16 %v1487
    %v1567 = vunpack.c.l.b16 %v1488
    %v1568 = vunpack.c.h.b16 %v1488
    %v1569 = vunpack.c.l.b16 %v1489
    %v1570 = vunpack.c.h.b16 %v1489
    %v1571 = vunpack.c.l.b16 %v1490
    %v1572 = vunpack.c.h.b16 %v1490
    %v1573 = vunpack.c.l.b16 %v1491
    %v1574 = vunpack.c.h.b16 %v1491
    %v1575 = vunpack.c.l.b16 %v1492
    %v1576 = vunpack.c.h.b16 %v1492
    %v1577 = vunpack.c.l.b16 %v1493
    %v1578 = vunpack.c.h.b16 %v1493
    %v1579 = vunpack.c.l.b16 %v1494
    %v1580 = vunpack.c.h.b16 %v1494
    %v1581 = vunpack.c.l.b16 %v1495
    %v1582 = vunpack.c.h.b16 %v1495
    %v1583 = vunpack.c.l.b16 %v1496
    %v1584 = vunpack.c.h.b16 %v1496
    %v1585 = vunpack.c.l.b16 %v1497
    %v1586 = vunpack.c.h.b16 %v1497
    %v1587 = vunpack.c.l.b16 %v1498
    %v1588 = vunpack.c.h.b16 %v1498
    %v1589 = vunpack.c.l.b16 %v1499
    %v1590 = vunpack.c.h.b16 %v1499
    %v1591 = vunpack.c.l.b16 %v1500
    %v1592 = vunpack.c.h.b16 %v1500
    %v1593 = vunpack.c.l.b16 %v1501
    %v1594 = vunpack.c.h.b16 %v1501
    %v1595 = vunpack.c.l.b16 %v1502
    %v1596 = vunpack.c.h.b16 %v1502
    %v1597 = vunpack.c.l.b16 %v1503
    %v1598 = vunpack.c.h.b16 %v1503
    %v1599 = vunpack.c.l.b16 %v1504
    %v1600 = vunpack.c.h.b16 %v1504
    %v1601 = vpack.c.b16 %v1539, %v1537
    %v1602 = vpack.c.b16 %v1540, %v1538
    %v1603 = vpack.c.b16 %v1543, %v1541
    %v1604 = vpack.c.b16 %v1544, %v1542
    %v1605 = vpack.c.b16 %v1547, %v1545
    %v1606 = vpack.c.b16 %v1548, %v1546
    %v1607 = vpack.c.b16 %v1551, %v1549
    %v1608 = vpack.c.b16 %v1552, %v1550
    %v1609 = vpack.c.b16 %v1555, %v1553
    %v1610 = vpack.c.b16 %v1556, %v1554
    %v1611 = vpack.c.b16 %v1559, %v1557
    %v1612 = vpack.c.b16 %v1560, %v1558
    %v1613 = vpack.c.b16 %v1563, %v1561
    %v1614 = vpack.c.b16 %v1564, %v1562
    %v1615 = vpack.c.b16 %v1567, %v1565
    %v1616 = vpack.c.b16 %v1568, %v1566
    %v1617 = vpack.c.b16 %v1571, %v1569
    %v1618 = vpack.c.b16 %v1572, %v1570
    %v1619 = vpack.c.b16 %v1575, %v1573
    %v1620 = vpack.c.b16 %v1576, %v1574
    %v1621 = vpack.c.b16 %v1579, %v1577
    %v1622 = vpack.c.b16 %v1580, %v1578
    %v1623 = vpack.c.b16 %v1583, %v1581
    %v1624 = vpack.c.b16 %v1584, %v1582
    %v1625 = vpack.c.b16 %v1587, %v1585
    %v1626 = vpack.c.b16 %v1588, %v1586
    %v1627 = vpack.c.b16 %v1591, %v1589
    %v1628 = vpack.c.b16 %v1592, %v1590
    %v1629 = vpack.c.b16 %v1595, %v1593
    %v1630 = vpack.c.b16 %v1596, %v1594
    %v1631 = vpack.c.b16 %v1599, %v1597
    %v1632 = vpack.c.b16 %v1600, %v1598
    %1665 = vmatprep.subr.bf16.mxu0 %v1602
    %1666 = vmatpush1.bf16.msra.mxu0 %v1601
    %1667 = vmatprep.subr.bf16.mxu0 %v1604
    %1668 = vmatpush1.bf16.msra.mxu0 %v1603
    %1669 = vmatprep.subr.bf16.mxu0 %v1606
    %1670 = vmatpush1.bf16.msra.mxu0 %v1605
    %1671 = vmatprep.subr.bf16.mxu0 %v1608
    %1672 = vmatpush1.bf16.msra.mxu0 %v1607
    %1673 = vmatprep.subr.bf16.mxu0 %v1610
    %1674 = vmatpush1.bf16.msra.mxu0 %v1609
    %1675 = vmatprep.subr.bf16.mxu0 %v1612
    %1676 = vmatpush1.bf16.msra.mxu0 %v1611
    %1677 = vmatprep.subr.bf16.mxu0 %v1614
    %1678 = vmatpush1.bf16.msra.mxu0 %v1613
    %1679 = vmatprep.subr.bf16.mxu0 %v1616
    %1680 = vmatpush1.bf16.msra.mxu0 %v1615
    %1681 = vmatprep.subr.bf16.mxu0 %v1618
    %1682 = vmatpush1.bf16.msra.mxu0 %v1617
    %1683 = vmatprep.subr.bf16.mxu0 %v1620
    %1684 = vmatpush1.bf16.msra.mxu0 %v1619
    %1685 = vmatprep.subr.bf16.mxu0 %v1622
    %1686 = vmatpush1.bf16.msra.mxu0 %v1621
    %1687 = vmatprep.subr.bf16.mxu0 %v1624
    %1688 = vmatpush1.bf16.msra.mxu0 %v1623
    %1689 = vmatprep.subr.bf16.mxu0 %v1626
    %1690 = vmatpush1.bf16.msra.mxu0 %v1625
    %1691 = vmatprep.subr.bf16.mxu0 %v1628
    %1692 = vmatpush1.bf16.msra.mxu0 %v1627
    %1693 = vmatprep.subr.bf16.mxu0 %v1630
    %1694 = vmatpush1.bf16.msra.mxu0 %v1629
    %1695 = vmatprep.subr.bf16.mxu0 %v1632
    %1696 = vmatpush1.bf16.msra.mxu0 %v1631
    %1697 = vmatprep.mubr.bf16.mxu0 %v1472
    %1698 = vmatmul.mubr.bf16.gmra.mrb[0].mxu0 %v1471
    %v1699 = vpop.f32.mrb[0].mxu0
    %v1700 = vadd.f32 0.0, %v1699
    %v1701 = vpop.f32.mrb[0].mxu0
    %v1702 = vadd.f32 0.0, %v1701
    %v1703 = vpop.f32.mrb[0].mxu0
    %v1704 = vpop.f32.mrb[0].mxu0
    %1705 = vdwg.mxu0
    %v1738 = vunpack.c.l.b16 %v941
    %v1739 = vunpack.c.h.b16 %v941
    %v1740 = vunpack.c.l.b16 %v942
    %v1741 = vunpack.c.h.b16 %v942
    %v1742 = vunpack.c.l.b16 %v943
    %v1743 = vunpack.c.h.b16 %v943
    %v1744 = vunpack.c.l.b16 %v944
    %v1745 = vunpack.c.h.b16 %v944
    %v1746 = vunpack.c.l.b16 %v945
    %v1747 = vunpack.c.h.b16 %v945
    %v1748 = vunpack.c.l.b16 %v946
    %v1749 = vunpack.c.h.b16 %v946
    %v1750 = vunpack.c.l.b16 %v947
    %v1751 = vunpack.c.h.b16 %v947
    %v1752 = vunpack.c.l.b16 %v948
    %v1753 = vunpack.c.h.b16 %v948
    %v1754 = vunpack.c.l.b16 %v949
    %v1755 = vunpack.c.h.b16 %v949
    %v1756 = vunpack.c.l.b16 %v950
    %v1757 = vunpack.c.h.b16 %v950
    %v1758 = vunpack.c.l.b16 %v951
    %v1759 = vunpack.c.h.b16 %v951
    %v1760 = vunpack.c.l.b16 %v952
    %v1761 = vunpack.c.h.b16 %v952
    %v1762 = vunpack.c.l.b16 %v953
    %v1763 = vunpack.c.h.b16 %v953
    %v1764 = vunpack.c.l.b16 %v954
    %v1765 = vunpack.c.h.b16 %v954
    %v1766 = vunpack.c.l.b16 %v955
    %v1767 = vunpack.c.h.b16 %v955
    %v1768 = vunpack.c.l.b16 %v956
    %v1769 = vunpack.c.h.b16 %v956
    %v1770 = vunpack.c.l.b16 %v957
    %v1771 = vunpack.c.h.b16 %v957
    %v1772 = vunpack.c.l.b16 %v958
    %v1773 = vunpack.c.h.b16 %v958
    %v1774 = vunpack.c.l.b16 %v959
    %v1775 = vunpack.c.h.b16 %v959
    %v1776 = vunpack.c.l.b16 %v960
    %v1777 = vunpack.c.h.b16 %v960
    %v1778 = vunpack.c.l.b16 %v961
    %v1779 = vunpack.c.h.b16 %v961
    %v1780 = vunpack.c.l.b16 %v962
    %v1781 = vunpack.c.h.b16 %v962
    %v1782 = vunpack.c.l.b16 %v963
    %v1783 = vunpack.c.h.b16 %v963
    %v1784 = vunpack.c.l.b16 %v964
    %v1785 = vunpack.c.h.b16 %v964
    %v1786 = vunpack.c.l.b16 %v965
    %v1787 = vunpack.c.h.b16 %v965
    %v1788 = vunpack.c.l.b16 %v966
    %v1789 = vunpack.c.h.b16 %v966
    %v1790 = vunpack.c.l.b16 %v967
    %v1791 = vunpack.c.h.b16 %v967
    %v1792 = vunpack.c.l.b16 %v968
    %v1793 = vunpack.c.h.b16 %v968
    %v1794 = vunpack.c.l.b16 %v969
    %v1795 = vunpack.c.h.b16 %v969
    %v1796 = vunpack.c.l.b16 %v970
    %v1797 = vunpack.c.h.b16 %v970
    %v1798 = vunpack.c.l.b16 %v971
    %v1799 = vunpack.c.h.b16 %v971
    %v1800 = vunpack.c.l.b16 %v972
    %v1801 = vunpack.c.h.b16 %v972
    %v1802 = vpack.c.b16 %v1740, %v1738
    %v1803 = vpack.c.b16 %v1741, %v1739
    %v1804 = vpack.c.b16 %v1744, %v1742
    %v1805 = vpack.c.b16 %v1745, %v1743
    %v1806 = vpack.c.b16 %v1748, %v1746
    %v1807 = vpack.c.b16 %v1749, %v1747
    %v1808 = vpack.c.b16 %v1752, %v1750
    %v1809 = vpack.c.b16 %v1753, %v1751
    %v1810 = vpack.c.b16 %v1756, %v1754
    %v1811 = vpack.c.b16 %v1757, %v1755
    %v1812 = vpack.c.b16 %v1760, %v1758
    %v1813 = vpack.c.b16 %v1761, %v1759
    %v1814 = vpack.c.b16 %v1764, %v1762
    %v1815 = vpack.c.b16 %v1765, %v1763
    %v1816 = vpack.c.b16 %v1768, %v1766
    %v1817 = vpack.c.b16 %v1769, %v1767
    %v1818 = vpack.c.b16 %v1772, %v1770
    %v1819 = vpack.c.b16 %v1773, %v1771
    %v1820 = vpack.c.b16 %v1776, %v1774
    %v1821 = vpack.c.b16 %v1777, %v1775
    %v1822 = vpack.c.b16 %v1780, %v1778
    %v1823 = vpack.c.b16 %v1781, %v1779
    %v1824 = vpack.c.b16 %v1784, %v1782
    %v1825 = vpack.c.b16 %v1785, %v1783
    %v1826 = vpack.c.b16 %v1788, %v1786
    %v1827 = vpack.c.b16 %v1789, %v1787
    %v1828 = vpack.c.b16 %v1792, %v1790
    %v1829 = vpack.c.b16 %v1793, %v1791
    %v1830 = vpack.c.b16 %v1796, %v1794
    %v1831 = vpack.c.b16 %v1797, %v1795
    %v1832 = vpack.c.b16 %v1800, %v1798
    %v1833 = vpack.c.b16 %v1801, %v1799
    %1866 = vmatprep.subr.bf16.mxu0 %v1803
    %1867 = vmatpush1.bf16.msra.mxu0 %v1802
    %1868 = vmatprep.subr.bf16.mxu0 %v1805
    %1869 = vmatpush1.bf16.msra.mxu0 %v1804
    %1870 = vmatprep.subr.bf16.mxu0 %v1807
    %1871 = vmatpush1.bf16.msra.mxu0 %v1806
    %1872 = vmatprep.subr.bf16.mxu0 %v1809
    %1873 = vmatpush1.bf16.msra.mxu0 %v1808
    %1874 = vmatprep.subr.bf16.mxu0 %v1811
    %1875 = vmatpush1.bf16.msra.mxu0 %v1810
    %1876 = vmatprep.subr.bf16.mxu0 %v1813
    %1877 = vmatpush1.bf16.msra.mxu0 %v1812
    %1878 = vmatprep.subr.bf16.mxu0 %v1815
    %1879 = vmatpush1.bf16.msra.mxu0 %v1814
    %1880 = vmatprep.subr.bf16.mxu0 %v1817
    %1881 = vmatpush1.bf16.msra.mxu0 %v1816
    %1882 = vmatprep.subr.bf16.mxu0 %v1819
    %1883 = vmatpush1.bf16.msra.mxu0 %v1818
    %1884 = vmatprep.subr.bf16.mxu0 %v1821
    %1885 = vmatpush1.bf16.msra.mxu0 %v1820
    %1886 = vmatprep.subr.bf16.mxu0 %v1823
    %1887 = vmatpush1.bf16.msra.mxu0 %v1822
    %1888 = vmatprep.subr.bf16.mxu0 %v1825
    %1889 = vmatpush1.bf16.msra.mxu0 %v1824
    %1890 = vmatprep.subr.bf16.mxu0 %v1827
    %1891 = vmatpush1.bf16.msra.mxu0 %v1826
    %1892 = vmatprep.subr.bf16.mxu0 %v1829
    %1893 = vmatpush1.bf16.msra.mxu0 %v1828
    %1894 = vmatprep.subr.bf16.mxu0 %v1831
    %1895 = vmatpush1.bf16.msra.mxu0 %v1830
    %1896 = vmatprep.subr.bf16.mxu0 %v1833
    %1897 = vmatpush1.bf16.msra.mxu0 %v1832
    %1898 = vmatprep.mubr.bf16.mxu0 %v940
    %1899 = vmatmul.mubr.bf16.gmra.mrb[0].mxu0 %v939
    %v1900 = vpop.f32.mrb[0].mxu0
    %v1901 = vadd.f32 %v1700, %v1900
    %v1902 = vpop.f32.mrb[0].mxu0
    %v1903 = vadd.f32 %v1702, %v1902
    %v1904 = vpop.f32.mrb[0].mxu0
    %v1905 = vpop.f32.mrb[0].mxu0
    %1906 = vdwg.mxu0
    %v1907 = vld [vmem:[%s10] sm:$0x3]
    %v1909 = vlaneseq
    %v1910 = vshrl.u32 %v1909, 7
    %v1911 = vsub.s32 0, %v1910
    %v1912 = vrot.slane %v1907, %v1911
    %v1913 = vlaneseq
    %v1914 = vshrl.u32 %v1913, 7
    %v1915 = vsub.s32 1, %v1914
    %v1916 = vrot.slane %v1907, %v1915
    %v1919 = vadd.f32 %v1901, %v1912
    %v1920 = vadd.f32 %v1903, %v1916
    %v1921 = vpack.c.bf16 %v1919, %v1919
    %v1922 = vpack.c.bf16 %v1920, %v1920
    %vm1923 = vcmp.ge.bf16.partialorder %v1921, 0
    %vm1924 = vcmp.ge.bf16.partialorder %v1922, 0
    %v1925 = vmul.bf16 %v1921, 1056980736
    %v1926 = vmul.bf16 %v1922, 1056980736
    %v1927 = vsel %vm1923, %v1921, %v1925
    %v1928 = vsel %vm1924, %v1922, %v1926
    %v1929 = vld [vmem:[#allocation15] sm:$0xf]
    %v1930 = vld [vmem:[#allocation15 + $0x4] sm:$0xf]
    %v1931 = vld [vmem:[#allocation15 + $0x8] sm:$0xf]
    %v1932 = vld [vmem:[#allocation15 + $0xc] sm:$0xf]
    %v1933 = vld [vmem:[#allocation15 + $0x10] sm:$0xf]
    %v1934 = vld [vmem:[#allocation15 + $0x14] sm:$0xf]
    %v1935 = vld [vmem:[#allocation15 + $0x18] sm:$0xf]
    %v1936 = vld [vmem:[#allocation15 + $0x1c] sm:$0xf]
    %v1937 = vld [vmem:[#allocation15 + $0x20] sm:$0xf]
    %v1938 = vld [vmem:[#allocation15 + $0x24] sm:$0xf]
    %v1939 = vld [vmem:[#allocation15 + $0x28] sm:$0xf]
    %v1940 = vld [vmem:[#allocation15 + $0x2c] sm:$0xf]
    %v1941 = vld [vmem:[#allocation15 + $0x30] sm:$0xf]
    %v1942 = vld [vmem:[#allocation15 + $0x34] sm:$0xf]
    %v1943 = vld [vmem:[#allocation15 + $0x38] sm:$0xf]
    %v1944 = vld [vmem:[#allocation15 + $0x3c] sm:$0xf]
    %v1945 = vld [vmem:[#allocation15 + $0x40] sm:$0xf]
    %v1946 = vld [vmem:[#allocation15 + $0x44] sm:$0xf]
    %v1947 = vld [vmem:[#allocation15 + $0x48] sm:$0xf]
    %v1948 = vld [vmem:[#allocation15 + $0x4c] sm:$0xf]
    %v1949 = vld [vmem:[#allocation15 + $0x50] sm:$0xf]
    %v1950 = vld [vmem:[#allocation15 + $0x54] sm:$0xf]
    %v1951 = vld [vmem:[#allocation15 + $0x58] sm:$0xf]
    %v1952 = vld [vmem:[#allocation15 + $0x5c] sm:$0xf]
    %v1953 = vld [vmem:[#allocation15 + $0x60] sm:$0xf]
    %v1954 = vld [vmem:[#allocation15 + $0x64] sm:$0xf]
    %v1955 = vld [vmem:[#allocation15 + $0x68] sm:$0xf]
    %v1956 = vld [vmem:[#allocation15 + $0x6c] sm:$0xf]
    %v1957 = vld [vmem:[#allocation15 + $0x70] sm:$0xf]
    %v1958 = vld [vmem:[#allocation15 + $0x74] sm:$0xf]
    %v1959 = vld [vmem:[#allocation15 + $0x78] sm:$0xf]
    %v1960 = vld [vmem:[#allocation15 + $0x7c] sm:$0xf]
    %v1961 = vld [vmem:[%s12] sm:$0x1]
    %v1963 = vlaneseq
    %v1964 = vshrl.u32 %v1963, 7
    %v1965 = vsub.s32 0, %v1964
    %v1966 = vrot.slane %v1961, %v1965
    %v2000 = vunpack.c.l.b16 %v1929
    %v2001 = vunpack.c.l.b16 %v1930
    %v2002 = vunpack.c.l.b16 %v1931
    %v2003 = vunpack.c.l.b16 %v1932
    %v2004 = vunpack.c.l.b16 %v1933
    %v2005 = vunpack.c.l.b16 %v1934
    %v2006 = vunpack.c.l.b16 %v1935
    %v2007 = vunpack.c.l.b16 %v1936
    %v2008 = vunpack.c.l.b16 %v1937
    %v2009 = vunpack.c.l.b16 %v1938
    %v2010 = vunpack.c.l.b16 %v1939
    %v2011 = vunpack.c.l.b16 %v1940
    %v2012 = vunpack.c.l.b16 %v1941
    %v2013 = vunpack.c.l.b16 %v1942
    %v2014 = vunpack.c.l.b16 %v1943
    %v2015 = vunpack.c.l.b16 %v1944
    %v2016 = vunpack.c.l.b16 %v1945
    %v2017 = vunpack.c.l.b16 %v1946
    %v2018 = vunpack.c.l.b16 %v1947
    %v2019 = vunpack.c.l.b16 %v1948
    %v2020 = vunpack.c.l.b16 %v1949
    %v2021 = vunpack.c.l.b16 %v1950
    %v2022 = vunpack.c.l.b16 %v1951
    %v2023 = vunpack.c.l.b16 %v1952
    %v2024 = vunpack.c.l.b16 %v1953
    %v2025 = vunpack.c.l.b16 %v1954
    %v2026 = vunpack.c.l.b16 %v1955
    %v2027 = vunpack.c.l.b16 %v1956
    %v2028 = vunpack.c.l.b16 %v1957
    %v2029 = vunpack.c.l.b16 %v1958
    %v2030 = vunpack.c.l.b16 %v1959
    %v2031 = vunpack.c.l.b16 %v1960
    %v2032 = vpack.c.b16 %v2001, %v2000
    %v2033 = vpack.c.b16 %v2003, %v2002
    %v2034 = vpack.c.b16 %v2005, %v2004
    %v2035 = vpack.c.b16 %v2007, %v2006
    %v2036 = vpack.c.b16 %v2009, %v2008
    %v2037 = vpack.c.b16 %v2011, %v2010
    %v2038 = vpack.c.b16 %v2013, %v2012
    %v2039 = vpack.c.b16 %v2015, %v2014
    %v2040 = vpack.c.b16 %v2017, %v2016
    %v2041 = vpack.c.b16 %v2019, %v2018
    %v2042 = vpack.c.b16 %v2021, %v2020
    %v2043 = vpack.c.b16 %v2023, %v2022
    %v2044 = vpack.c.b16 %v2025, %v2024
    %v2045 = vpack.c.b16 %v2027, %v2026
    %v2046 = vpack.c.b16 %v2029, %v2028
    %v2047 = vpack.c.b16 %v2031, %v2030
    %2064 = vmatprep.subr.bf16.mxu0 0
    %2065 = vmatpush1.bf16.msra.mxu0 %v2032
    %2066 = vmatprep.subr.bf16.mxu0 0
    %2067 = vmatpush1.bf16.msra.mxu0 %v2033
    %2068 = vmatprep.subr.bf16.mxu0 0
    %2069 = vmatpush1.bf16.msra.mxu0 %v2034
    %2070 = vmatprep.subr.bf16.mxu0 0
    %2071 = vmatpush1.bf16.msra.mxu0 %v2035
    %2072 = vmatprep.subr.bf16.mxu0 0
    %2073 = vmatpush1.bf16.msra.mxu0 %v2036
    %2074 = vmatprep.subr.bf16.mxu0 0
    %2075 = vmatpush1.bf16.msra.mxu0 %v2037
    %2076 = vmatprep.subr.bf16.mxu0 0
    %2077 = vmatpush1.bf16.msra.mxu0 %v2038
    %2078 = vmatprep.subr.bf16.mxu0 0
    %2079 = vmatpush1.bf16.msra.mxu0 %v2039
    %2080 = vmatprep.subr.bf16.mxu0 0
    %2081 = vmatpush1.bf16.msra.mxu0 %v2040
    %2082 = vmatprep.subr.bf16.mxu0 0
    %2083 = vmatpush1.bf16.msra.mxu0 %v2041
    %2084 = vmatprep.subr.bf16.mxu0 0
    %2085 = vmatpush1.bf16.msra.mxu0 %v2042
    %2086 = vmatprep.subr.bf16.mxu0 0
    %2087 = vmatpush1.bf16.msra.mxu0 %v2043
    %2088 = vmatprep.subr.bf16.mxu0 0
    %2089 = vmatpush1.bf16.msra.mxu0 %v2044
    %2090 = vmatprep.subr.bf16.mxu0 0
    %2091 = vmatpush1.bf16.msra.mxu0 %v2045
    %2092 = vmatprep.subr.bf16.mxu0 0
    %2093 = vmatpush1.bf16.msra.mxu0 %v2046
    %2094 = vmatprep.subr.bf16.mxu0 0
    %2095 = vmatpush1.bf16.msra.mxu0 %v2047
    %2096 = vmatprep.mubr.bf16.mxu0 %v1928
    %2097 = vmatmul.mubr.bf16.gmra.mrb[0].mxu0 %v1927
    %v2098 = vpop.f32.mrb[0].mxu0
    %v2099 = vadd.f32 %v1966, %v2098
    %v2100 = vpop.f32.mrb[0].mxu0
    %v2101 = vpop.f32.mrb[0].mxu0
    %v2102 = vpop.f32.mrb[0].mxu0
    %2103 = vdwg.mxu0
    %v2104 = vld [vmem:[#allocation16] sm:$0xf]
    %v2105 = vld [vmem:[#allocation16 + $0x4] sm:$0xf]
    %v2106 = vld [vmem:[#allocation16 + $0x8] sm:$0xf]
    %v2107 = vld [vmem:[#allocation16 + $0xc] sm:$0xf]
    %v2108 = vld [vmem:[#allocation16 + $0x10] sm:$0xf]
    %v2109 = vld [vmem:[#allocation16 + $0x14] sm:$0xf]
    %v2110 = vld [vmem:[#allocation16 + $0x18] sm:$0xf]
    %v2111 = vld [vmem:[#allocation16 + $0x1c] sm:$0xf]
    %v2112 = vld [vmem:[#allocation16 + $0x20] sm:$0xf]
    %v2113 = vld [vmem:[#allocation16 + $0x24] sm:$0xf]
    %v2114 = vld [vmem:[#allocation16 + $0x28] sm:$0xf]
    %v2115 = vld [vmem:[#allocation16 + $0x2c] sm:$0xf]
    %v2116 = vld [vmem:[#allocation16 + $0x30] sm:$0xf]
    %v2117 = vld [vmem:[#allocation16 + $0x34] sm:$0xf]
    %v2118 = vld [vmem:[#allocation16 + $0x38] sm:$0xf]
    %v2119 = vld [vmem:[#allocation16 + $0x3c] sm:$0xf]
    %v2120 = vld [vmem:[#allocation16 + $0x40] sm:$0xf]
    %v2121 = vld [vmem:[#allocation16 + $0x44] sm:$0xf]
    %v2122 = vld [vmem:[#allocation16 + $0x48] sm:$0xf]
    %v2123 = vld [vmem:[#allocation16 + $0x4c] sm:$0xf]
    %v2124 = vld [vmem:[#allocation16 + $0x50] sm:$0xf]
    %v2125 = vld [vmem:[#allocation16 + $0x54] sm:$0xf]
    %v2126 = vld [vmem:[#allocation16 + $0x58] sm:$0xf]
    %v2127 = vld [vmem:[#allocation16 + $0x5c] sm:$0xf]
    %v2128 = vld [vmem:[#allocation16 + $0x60] sm:$0xf]
    %v2129 = vld [vmem:[#allocation16 + $0x64] sm:$0xf]
    %v2130 = vld [vmem:[#allocation16 + $0x68] sm:$0xf]
    %v2131 = vld [vmem:[#allocation16 + $0x6c] sm:$0xf]
    %v2132 = vld [vmem:[#allocation16 + $0x70] sm:$0xf]
    %v2133 = vld [vmem:[#allocation16 + $0x74] sm:$0xf]
    %v2134 = vld [vmem:[#allocation16 + $0x78] sm:$0xf]
    %v2135 = vld [vmem:[#allocation16 + $0x7c] sm:$0xf]
    %v2136 = vld [vmem:[%s14] sm:$0x1]
    %v2138 = vlaneseq
    %v2139 = vshrl.u32 %v2138, 7
    %v2140 = vsub.s32 0, %v2139
    %v2141 = vrot.slane %v2136, %v2140
    %v2175 = vunpack.c.l.b16 %v2104
    %v2176 = vunpack.c.l.b16 %v2105
    %v2177 = vunpack.c.l.b16 %v2106
    %v2178 = vunpack.c.l.b16 %v2107
    %v2179 = vunpack.c.l.b16 %v2108
    %v2180 = vunpack.c.l.b16 %v2109
    %v2181 = vunpack.c.l.b16 %v2110
    %v2182 = vunpack.c.l.b16 %v2111
    %v2183 = vunpack.c.l.b16 %v2112
    %v2184 = vunpack.c.l.b16 %v2113
    %v2185 = vunpack.c.l.b16 %v2114
    %v2186 = vunpack.c.l.b16 %v2115
    %v2187 = vunpack.c.l.b16 %v2116
    %v2188 = vunpack.c.l.b16 %v2117
    %v2189 = vunpack.c.l.b16 %v2118
    %v2190 = vunpack.c.l.b16 %v2119
    %v2191 = vunpack.c.l.b16 %v2120
    %v2192 = vunpack.c.l.b16 %v2121
    %v2193 = vunpack.c.l.b16 %v2122
    %v2194 = vunpack.c.l.b16 %v2123
    %v2195 = vunpack.c.l.b16 %v2124
    %v2196 = vunpack.c.l.b16 %v2125
    %v2197 = vunpack.c.l.b16 %v2126
    %v2198 = vunpack.c.l.b16 %v2127
    %v2199 = vunpack.c.l.b16 %v2128
    %v2200 = vunpack.c.l.b16 %v2129
    %v2201 = vunpack.c.l.b16 %v2130
    %v2202 = vunpack.c.l.b16 %v2131
    %v2203 = vunpack.c.l.b16 %v2132
    %v2204 = vunpack.c.l.b16 %v2133
    %v2205 = vunpack.c.l.b16 %v2134
    %v2206 = vunpack.c.l.b16 %v2135
    %v2207 = vpack.c.b16 %v2176, %v2175
    %v2208 = vpack.c.b16 %v2178, %v2177
    %v2209 = vpack.c.b16 %v2180, %v2179
    %v2210 = vpack.c.b16 %v2182, %v2181
    %v2211 = vpack.c.b16 %v2184, %v2183
    %v2212 = vpack.c.b16 %v2186, %v2185
    %v2213 = vpack.c.b16 %v2188, %v2187
    %v2214 = vpack.c.b16 %v2190, %v2189
    %v2215 = vpack.c.b16 %v2192, %v2191
    %v2216 = vpack.c.b16 %v2194, %v2193
    %v2217 = vpack.c.b16 %v2196, %v2195
    %v2218 = vpack.c.b16 %v2198, %v2197
    %v2219 = vpack.c.b16 %v2200, %v2199
    %v2220 = vpack.c.b16 %v2202, %v2201
    %v2221 = vpack.c.b16 %v2204, %v2203
    %v2222 = vpack.c.b16 %v2206, %v2205
    %2239 = vmatprep.subr.bf16.mxu0 0
    %2240 = vmatpush1.bf16.msra.mxu0 %v2207
    %2241 = vmatprep.subr.bf16.mxu0 0
    %2242 = vmatpush1.bf16.msra.mxu0 %v2208
    %2243 = vmatprep.subr.bf16.mxu0 0
    %2244 = vmatpush1.bf16.msra.mxu0 %v2209
    %2245 = vmatprep.subr.bf16.mxu0 0
    %2246 = vmatpush1.bf16.msra.mxu0 %v2210
    %2247 = vmatprep.subr.bf16.mxu0 0
    %2248 = vmatpush1.bf16.msra.mxu0 %v2211
    %2249 = vmatprep.subr.bf16.mxu0 0
    %2250 = vmatpush1.bf16.msra.mxu0 %v2212
    %2251 = vmatprep.subr.bf16.mxu0 0
    %2252 = vmatpush1.bf16.msra.mxu0 %v2213
    %2253 = vmatprep.subr.bf16.mxu0 0
    %2254 = vmatpush1.bf16.msra.mxu0 %v2214
    %2255 = vmatprep.subr.bf16.mxu0 0
    %2256 = vmatpush1.bf16.msra.mxu0 %v2215
    %2257 = vmatprep.subr.bf16.mxu0 0
    %2258 = vmatpush1.bf16.msra.mxu0 %v2216
    %2259 = vmatprep.subr.bf16.mxu0 0
    %2260 = vmatpush1.bf16.msra.mxu0 %v2217
    %2261 = vmatprep.subr.bf16.mxu0 0
    %2262 = vmatpush1.bf16.msra.mxu0 %v2218
    %2263 = vmatprep.subr.bf16.mxu0 0
    %2264 = vmatpush1.bf16.msra.mxu0 %v2219
    %2265 = vmatprep.subr.bf16.mxu0 0
    %2266 = vmatpush1.bf16.msra.mxu0 %v2220
    %2267 = vmatprep.subr.bf16.mxu0 0
    %2268 = vmatpush1.bf16.msra.mxu0 %v2221
    %2269 = vmatprep.subr.bf16.mxu0 0
    %2270 = vmatpush1.bf16.msra.mxu0 %v2222
    %2271 = vmatprep.mubr.bf16.mxu0 %v1928
    %2272 = vmatmul.mubr.bf16.gmra.mrb[0].mxu0 %v1927
    %v2273 = vpop.f32.mrb[0].mxu0
    %v2274 = vadd.f32 %v2141, %v2273
    %v2275 = vpop.f32.mrb[0].mxu0
    %v2276 = vpop.f32.mrb[0].mxu0
    %v2277 = vpop.f32.mrb[0].mxu0
    %2278 = vdwg.mxu0
    %v2279 = vmax.f32 %v2099, %v2274
    %v2280 = vtanh.pop %v2279
    %2281 = vst [vmem:[#allocation18] sm:$0xff] %v2280
    // Predicated region
    $region98: #{tpu_custom_call.1} parent=1 // pred_check
      _
    $region99: #{tpu_custom_call.1} parent=1 // pred_check_branch
      %2283 = sbr.rel (0) target = $region101
    $region100: #{tpu_custom_call.1} parent=1 // pred_region
      %s2285 = ssub.s32 128, 128
      %2286 = vsyncadd [#allocation4], %s2285
      %s2288 = sshll.u32 [#allocation18], 4
      %s2289 = int_to_ptr.vmem [resolvable:$true] %s2288
      %2291 = dma.vmem_to_hbm [thread:$0]  %s2289, 128, %s15, [#allocation4]
    $region101: #{tpu_custom_call.1} parent=1 // pred_fallthru
      _
    // Predicated region
    $region102: #{tpu_custom_call.1} parent=1 // pred_check
      _
    $region103: #{tpu_custom_call.1} parent=1 // pred_check_branch
      %2293 = sbr.rel (0) target = $region105
    $region104: #{tpu_custom_call.1} parent=1 // pred_region
      %2294 = dma.done [#allocation4], 128
    $region105: #{tpu_custom_call.1} parent=1 // pred_fallthru
      _
    %2295 = vsyncpa [#allocation3], 1
    %2296 = vsyncpa [#allocation8], 1
    %2297 = vsyncpa [#allocation11], 1
    %2298 = vsyncpa [#allocation14], 1
    %2299 = vsyncpa [#allocation17], 1
    %2300 = vsyncpa [#allocation4], 1
    %2301 = vsyncpa [#allocation5], 1

</llo_original>
